<compile_context>
chip_gen: v7x
topology: tpu7x:2x2x1
jax: 0.10.0
libtpu: 0.0.40
codegen_flags: <defaults>
</compile_context>

<pallas_src>
import math
import jax
import jax.numpy as jnp
from jax import lax
from jax.experimental import pallas as pl
from jax.experimental.pallas import tpu as pltpu

CENTER = 4          # forward pass reads sequence position 4
COS_EPS = 1e-8      # torch.nn.functional.cosine_similarity default eps


def proofreader_kernel(xproj_ref, xc_ref, invxc_ref, mvT_ref, invmv_ref,
                       wblk_ref, wfc_ref, bfc_ref, wfc2_ref, bfc2_ref,
                       out_ref):
    n = xproj_ref.shape[0]        # fused recurrence steps
    BM = xproj_ref.shape[1]       # batch tile
    H2 = xproj_ref.shape[2]       # 2 * hidden_dim

    # ---- attention = sigmoid(cosine_similarity(mean_vector, center_char_vec)) ----
    # dots: (BM, 1024) @ (1024, C) bf16 MXU matmul, f32 accumulation.
    dots = jnp.dot(xc_ref[...], mvT_ref[...], preferred_element_type=jnp.float32)
    # inverse norms are precomputed (exact, from f32 mean_vector); pure VPU broadcast.
    attn = jax.nn.sigmoid(dots * invxc_ref[...] * invmv_ref[...])

    # ---- fused bidirectional single-layer tanh RNN at t = CENTER ----
    # Input projections + both biases are folded into xproj (gathered in the wrapper);
    # the recurrent weight is block-diagonal, so one (BM,2H)@(2H,2H) matmul updates both
    # directions at once. Front zero-padding of the shorter direction is an exact no-op.
    wblk = wblk_ref[...]          # bf16 (2H, 2H)

    def step(s, h):
        pre = xproj_ref[s] + jnp.dot(h.astype(jnp.bfloat16), wblk,
                                     preferred_element_type=jnp.float32)
        return jnp.tanh(pre)

    h = lax.fori_loop(0, n, step, jnp.zeros((BM, H2), jnp.float32), unroll=True)

    # dropout(p=0.5) is identity at inference time.
    y = jnp.dot(h.astype(jnp.bfloat16), wfc_ref[...],
                preferred_element_type=jnp.float32) + bfc_ref[...]
    y = y * attn
    out_ref[...] = (jnp.dot(y.astype(jnp.bfloat16), wfc2_ref[...],
                            preferred_element_type=jnp.float32) + bfc2_ref[...])


def _rep_spec(shape):
    """Weight / replicated-input spec: same full block for every batch tile."""
    nd = len(shape)
    return pl.BlockSpec(shape, lambda i: (0,) * nd)


def prepare_params(params):
    """One-time (model-load) preprocessing: folded projections, transposed/bf16 weights."""
    mv = params["mean_vector"].astype(jnp.float32)          # (C, V)
    C, V = mv.shape
    H = params["whh_f"].shape[0]
    hp = lax.Precision.HIGHEST

    # Folded input projections: x_t @ W_ih^T + b_ih + b_hh == P[x_t_index]
    P_f = jnp.dot(mv, params["wih_f"].T, precision=hp) + (params["bih_f"] + params["bhh_f"])
    P_b = jnp.dot(mv, params["wih_b"].T, precision=hp) + (params["bih_b"] + params["bhh_b"])

    # Block-diagonal recurrent weight -> one (BM,2H)@(2H,2H) matmul per fused step.
    wblk = jnp.zeros((2 * H, 2 * H), jnp.float32)
    wblk = wblk.at[:H, :H].set(params["whh_f"].T).at[H:, H:].set(params["whh_b"].T)

    # Reciprocal row norms (per-factor eps clamp; zero rows give 0/eps -> sigmoid(0)=0.5,
    # identical to the product-clamped reference because the numerator is also 0).
    inv_norm = lax.rsqrt(jnp.maximum(jnp.sum(mv * mv, axis=1), COS_EPS ** 2))   # (C,)

    return {
        "C": C, "V": V, "H": H,
        "mean_vector": mv,                                   # (C, V) f32, for xc gather
        "P_f": P_f.astype(jnp.float32),                      # (C, H)
        "P_b": P_b.astype(jnp.float32),                      # (C, H)
        "wblk": wblk.astype(jnp.bfloat16),                   # (2H, 2H)
        "mvT": mv.T.astype(jnp.bfloat16),                    # (V, C)
        "mv_inv_norm": inv_norm.astype(jnp.float32),         # (C,)
        "wfc": params["wfc"].T.astype(jnp.bfloat16),         # (2H, C)
        "bfc": params["bfc"].reshape(1, C).astype(jnp.float32),
        "wfc2": params["wfc2"].T.astype(jnp.bfloat16),       # (C, C)
        "bfc2": params["bfc2"].reshape(1, C).astype(jnp.float32),
    }


def proofreader_forward(x_idx, prep):
    C, V, H = prep["C"], prep["V"], prep["H"]
    B, T = x_idx.shape
    assert T > CENTER

    n_f = CENTER + 1          # forward steps to reach t = CENTER
    n_b = T - CENTER          # backward steps to reach t = CENTER
    n = max(n_f, n_b)

    BM = min(128, max(8, -(-B // 8) * 8))   # batch tile (sublane multiple, <=128 rows)
    BP = -(-B // BM) * BM                    # padded batch

    mv = prep["mean_vector"]
    idx_c = x_idx[:, CENTER]
    xc = mv[idx_c]                                            # (B, V) f32, cast to bf16 below
    inv_xc = prep["mv_inv_norm"][idx_c].reshape(B, 1)         # exact ||xc||^-1 from table

    # Gather folded input projections per step; front-pad the shorter direction with zeros
    # (zero xproj + zero hidden stays exactly zero through tanh => exact no-op steps).
    xp_f = prep["P_f"][x_idx[:, :n_f]]                        # (B, n_f, H)
    xp_b = prep["P_b"][x_idx[:, ::-1][:, :n_b]]               # (B, n_b, H)
    xp_f = jnp.pad(xp_f, ((0, 0), (n - n_f, 0), (0, 0)))
    xp_b = jnp.pad(xp_b, ((0, 0), (n - n_b, 0), (0, 0)))
    xproj = jnp.concatenate([xp_f, xp_b], axis=-1)            # (B, n, 2H)
    xproj = jnp.transpose(xproj, (1, 0, 2))                   # (n, B, 2H) time-major

    # Pad batch to the tile multiple.
    xproj = jnp.pad(xproj, ((0, 0), (0, BP - B), (0, 0)))
    xc = jnp.pad(xc, ((0, BP - B), (0, 0))).astype(jnp.bfloat16)
    inv_xc = jnp.pad(inv_xc, ((0, BP - B), (0, 0)))
    inv_mv = prep["mv_inv_norm"].reshape(1, C)

    args = (xproj, xc, inv_xc, prep["mvT"], inv_mv,
            prep["wblk"], prep["wfc"], prep["bfc"], prep["wfc2"], prep["bfc2"])

    in_specs = [
        pl.BlockSpec((n, BM, 2 * H), lambda i: (0, i, 0)),    # xproj  (batch-tiled)
        pl.BlockSpec((BM, V), lambda i: (i, 0)),              # xc     (batch-tiled)
        pl.BlockSpec((BM, 1), lambda i: (i, 0)),              # inv_xc (batch-tiled)
        _rep_spec((V, C)),                                    # mvT
        _rep_spec((1, C)),                                    # inv_mv
        _rep_spec((2 * H, 2 * H)),                            # wblk
        _rep_spec((2 * H, C)),                                # wfc
        _rep_spec((1, C)),                                    # bfc
        _rep_spec((C, C)),                                    # wfc2
        _rep_spec((1, C)),                                    # bfc2
    ]

    out = pl.pallas_call(
        proofreader_kernel,
        out_shape=jax.ShapeDtypeStruct((BP, C), jnp.float32),
        grid_spec=pltpu.PrefetchScalarGridSpec(
            num_scalar_prefetch=0,
            grid=(BP // BM,),
            in_specs=in_specs,
            out_specs=pl.BlockSpec((BM, C), lambda i: (i, 0)),
        ),
        compiler_params=pltpu.CompilerParams(
            dimension_semantics=("parallel",)),
    )(*args)
    return out[:B]


def reference_forward(x_idx, params):
    """Pure-JAX reference mirroring the PyTorch forward (eval mode)."""
    mv = params["mean_vector"]
    B, T = x_idx.shape
    H = params["whh_f"].shape[0]
    xc = mv[x_idx[:, CENTER]]
    dots = xc @ mv.T
    sq = jnp.sum(xc * xc, 1)[:, None] * jnp.sum(mv * mv, 1)[None, :]
    attn = jax.nn.sigmoid(dots / jnp.sqrt(jnp.maximum(sq, COS_EPS ** 2)))
    embed = mv[x_idx]

    def run_dir(w_ih, w_hh, b_ih, b_hh, xs_tm):
        def step(h, x):
            h = jnp.tanh(x @ w_ih.T + b_ih + h @ w_hh.T + b_hh)
            return h, h
        _, hs = lax.scan(step, jnp.zeros((B, H), jnp.float32), xs_tm)
        return hs

    xs_tm = jnp.transpose(embed, (1, 0, 2))
    hs_f = run_dir(params["wih_f"], params["whh_f"], params["bih_f"], params["bhh_f"], xs_tm)
    hs_b = run_dir(params["wih_b"], params["whh_b"], params["bih_b"], params["bhh_b"], xs_tm[::-1])[::-1]
    h4 = jnp.concatenate([hs_f[CENTER], hs_b[CENTER]], axis=1)
    y = h4 @ params["wfc"].T + params["bfc"]
    y = y * attn
    y = y @ params["wfc2"].T + params["bfc2"]
    return y


if __name__ == "__main__":
    B, T = 2, 10                # batch, sequence window (k_num=10, center at index 4)
    C, V, H = 256, 1024, 128    # class_num, char2vec dim (RNN input_size=1024), hidden_dim

    key = jax.random.PRNGKey(0)
    keys = jax.random.split(key, 16)

    def uni(k, shape, bound):
        return jax.random.uniform(k, shape, jnp.float32, -bound, bound)

    kr = 1.0 / math.sqrt(H)
    mean_vector = jax.random.normal(keys[0], (C, V), jnp.float32)
    mean_vector = mean_vector.at[jnp.array([0, 5])].set(0.0)   # mimic KeyError -> zero rows

    params = {
        "mean_vector": mean_vector,
        "wih_f": uni(keys[1], (H, V), kr), "whh_f": uni(keys[2], (H, H), kr),
        "bih_f": uni(keys[3], (H,), kr),   "bhh_f": uni(keys[4], (H,), kr),
        "wih_b": uni(keys[5], (H, V), kr), "whh_b": uni(keys[6], (H, H), kr),
        "bih_b": uni(keys[7], (H,), kr),   "bhh_b": uni(keys[8], (H,), kr),
        "wfc":  uni(keys[9], (C, 2 * H), 1.0 / math.sqrt(2 * H)),
        "bfc":  uni(keys[10], (C,), 1.0 / math.sqrt(2 * H)),
        "wfc2": uni(keys[11], (C, C), 1.0 / math.sqrt(C)),
        "bfc2": uni(keys[12], (C,), 1.0 / math.sqrt(C)),
    }
    x = jax.random.randint(keys[13], (B, T), 0, C, dtype=jnp.int32)

    prep = prepare_params(params)            # one-time model-load preprocessing
    out = proofreader_forward(x, prep)
    out = jax.block_until_ready(out)
    ref = reference_forward(x, params)

    assert out.shape == (B, C), out.shape
    assert bool(jnp.allclose(out, ref, rtol=5e-2, atol=5e-2)), (
        f"max abs diff {float(jnp.max(jnp.abs(out - ref)))}")
    print("KERNEL_OK")
</pallas_src>

<mosaic_0001>
module attributes {stable_mosaic.version = 11 : i64} {
  func.func @proofreader_kernel(%arg0: i32, %arg1: memref<6x8x256xf32, #tpu.memory_space<vmem>>, %arg2: memref<8x1024xbf16, #tpu.memory_space<vmem>>, %arg3: memref<8x1xf32, #tpu.memory_space<vmem>>, %arg4: memref<1024x256xbf16, #tpu.memory_space<vmem>>, %arg5: memref<1x256xf32, #tpu.memory_space<vmem>>, %arg6: memref<256x256xbf16, #tpu.memory_space<vmem>>, %arg7: memref<256x256xbf16, #tpu.memory_space<vmem>>, %arg8: memref<1x256xf32, #tpu.memory_space<vmem>>, %arg9: memref<256x256xbf16, #tpu.memory_space<vmem>>, %arg10: memref<1x256xf32, #tpu.memory_space<vmem>>, %arg11: memref<8x256xf32, #tpu.memory_space<vmem>>) attributes {dimension_semantics = [#tpu.dimension_semantics<parallel>], iteration_bounds = array<i64: 1>, scalar_prefetch = 0 : i64, scratch_operands = 0 : i64, tpu.core_type = #tpu.core_type<tc>, window_params = [{transform_indices = @transform_0, window_bounds = array<i64: 6, 8, 256>}, {transform_indices = @transform_1, window_bounds = array<i64: 8, 1024>}, {transform_indices = @transform_2, window_bounds = array<i64: 8, 1>}, {pipeline_mode = #tpu.pipeline_mode<synchronous>, transform_indices = @transform_3, window_bounds = array<i64: 1024, 256>}, {pipeline_mode = #tpu.pipeline_mode<synchronous>, transform_indices = @transform_4, window_bounds = array<i64: 1, 256>}, {pipeline_mode = #tpu.pipeline_mode<synchronous>, transform_indices = @transform_5, window_bounds = array<i64: 256, 256>}, {pipeline_mode = #tpu.pipeline_mode<synchronous>, transform_indices = @transform_6, window_bounds = array<i64: 256, 256>}, {pipeline_mode = #tpu.pipeline_mode<synchronous>, transform_indices = @transform_7, window_bounds = array<i64: 1, 256>}, {pipeline_mode = #tpu.pipeline_mode<synchronous>, transform_indices = @transform_8, window_bounds = array<i64: 256, 256>}, {pipeline_mode = #tpu.pipeline_mode<synchronous>, transform_indices = @transform_9, window_bounds = array<i64: 1, 256>}, {transform_indices = @transform_10, window_bounds = array<i64: 8, 256>}]} {
    %c0 = arith.constant 0 : index
    %c0_0 = arith.constant 0 : index
    %0 = vector.load %arg2[%c0, %c0_0] : memref<8x1024xbf16, #tpu.memory_space<vmem>>, vector<8x1024xbf16>
    %c0_1 = arith.constant 0 : index
    %c0_2 = arith.constant 0 : index
    %1 = vector.load %arg4[%c0_1, %c0_2] : memref<1024x256xbf16, #tpu.memory_space<vmem>>, vector<1024x256xbf16>
    %cst = arith.constant dense<0.000000e+00> : vector<8x256xf32>
    %2 = tpu.matmul %0, %1, %cst {dimension_numbers = #tpu.dot_dimension_numbers<[1], [0], [0], [1], [0, 0, 1, 1], [], []>} : vector<8x1024xbf16>, vector<1024x256xbf16>, vector<8x256xf32> -> vector<8x256xf32>
    %c0_3 = arith.constant 0 : index
    %c0_4 = arith.constant 0 : index
    %3 = vector.load %arg3[%c0_3, %c0_4] : memref<8x1xf32, #tpu.memory_space<vmem>>, vector<8x1xf32>
    %4 = vector.broadcast %3 : vector<8x1xf32> to vector<8x256xf32>
    %5 = arith.mulf %2, %4 : vector<8x256xf32>
    %c0_5 = arith.constant 0 : index
    %c0_6 = arith.constant 0 : index
    %6 = vector.load %arg5[%c0_5, %c0_6] : memref<1x256xf32, #tpu.memory_space<vmem>>, vector<1x256xf32>
    %7 = vector.broadcast %6 : vector<1x256xf32> to vector<8x256xf32>
    %8 = arith.mulf %5, %7 : vector<8x256xf32>
    %9 = arith.negf %8 : vector<8x256xf32>
    %10 = math.exp %9 : vector<8x256xf32>
    %cst_7 = arith.constant 1.000000e+00 : f32
    %11 = vector.broadcast %cst_7 : f32 to vector<8x256xf32>
    %12 = arith.addf %11, %10 : vector<8x256xf32>
    %13 = arith.divf %11, %12 : vector<8x256xf32>
    %c0_8 = arith.constant 0 : index
    %c0_9 = arith.constant 0 : index
    %14 = vector.load %arg6[%c0_8, %c0_9] : memref<256x256xbf16, #tpu.memory_space<vmem>>, vector<256x256xbf16>
    %cst_10 = arith.constant 0.000000e+00 : f32
    %15 = vector.broadcast %cst_10 : f32 to vector<8x256xf32>
    %c0_i32 = arith.constant 0 : i32
    %16 = arith.index_cast %c0_i32 : i32 to index
    %c0_11 = arith.constant 0 : index
    %c0_12 = arith.constant 0 : index
    %17 = vector.load %arg1[%16, %c0_11, %c0_12] : memref<6x8x256xf32, #tpu.memory_space<vmem>>, vector<1x8x256xf32>
    %18 = vector.shape_cast %17 : vector<1x8x256xf32> to vector<8x256xf32>
    %19 = arith.truncf %15 : vector<8x256xf32> to vector<8x256xbf16>
    %cst_13 = arith.constant dense<0.000000e+00> : vector<8x256xf32>
    %20 = tpu.matmul %19, %14, %cst_13 {dimension_numbers = #tpu.dot_dimension_numbers<[1], [0], [0], [1], [0, 0, 1, 1], [], []>} : vector<8x256xbf16>, vector<256x256xbf16>, vector<8x256xf32> -> vector<8x256xf32>
    %21 = arith.addf %18, %20 : vector<8x256xf32>
    %22 = math.tanh %21 : vector<8x256xf32>
    %c1_i32 = arith.constant 1 : i32
    %23 = arith.index_cast %c1_i32 : i32 to index
    %c0_14 = arith.constant 0 : index
    %c0_15 = arith.constant 0 : index
    %24 = vector.load %arg1[%23, %c0_14, %c0_15] : memref<6x8x256xf32, #tpu.memory_space<vmem>>, vector<1x8x256xf32>
    %25 = vector.shape_cast %24 : vector<1x8x256xf32> to vector<8x256xf32>
    %26 = arith.truncf %22 : vector<8x256xf32> to vector<8x256xbf16>
    %cst_16 = arith.constant dense<0.000000e+00> : vector<8x256xf32>
    %27 = tpu.matmul %26, %14, %cst_16 {dimension_numbers = #tpu.dot_dimension_numbers<[1], [0], [0], [1], [0, 0, 1, 1], [], []>} : vector<8x256xbf16>, vector<256x256xbf16>, vector<8x256xf32> -> vector<8x256xf32>
    %28 = arith.addf %25, %27 : vector<8x256xf32>
    %29 = math.tanh %28 : vector<8x256xf32>
    %c2_i32 = arith.constant 2 : i32
    %30 = arith.index_cast %c2_i32 : i32 to index
    %c0_17 = arith.constant 0 : index
    %c0_18 = arith.constant 0 : index
    %31 = vector.load %arg1[%30, %c0_17, %c0_18] : memref<6x8x256xf32, #tpu.memory_space<vmem>>, vector<1x8x256xf32>
    %32 = vector.shape_cast %31 : vector<1x8x256xf32> to vector<8x256xf32>
    %33 = arith.truncf %29 : vector<8x256xf32> to vector<8x256xbf16>
    %cst_19 = arith.constant dense<0.000000e+00> : vector<8x256xf32>
    %34 = tpu.matmul %33, %14, %cst_19 {dimension_numbers = #tpu.dot_dimension_numbers<[1], [0], [0], [1], [0, 0, 1, 1], [], []>} : vector<8x256xbf16>, vector<256x256xbf16>, vector<8x256xf32> -> vector<8x256xf32>
    %35 = arith.addf %32, %34 : vector<8x256xf32>
    %36 = math.tanh %35 : vector<8x256xf32>
    %c3_i32 = arith.constant 3 : i32
    %37 = arith.index_cast %c3_i32 : i32 to index
    %c0_20 = arith.constant 0 : index
    %c0_21 = arith.constant 0 : index
    %38 = vector.load %arg1[%37, %c0_20, %c0_21] : memref<6x8x256xf32, #tpu.memory_space<vmem>>, vector<1x8x256xf32>
    %39 = vector.shape_cast %38 : vector<1x8x256xf32> to vector<8x256xf32>
    %40 = arith.truncf %36 : vector<8x256xf32> to vector<8x256xbf16>
    %cst_22 = arith.constant dense<0.000000e+00> : vector<8x256xf32>
    %41 = tpu.matmul %40, %14, %cst_22 {dimension_numbers = #tpu.dot_dimension_numbers<[1], [0], [0], [1], [0, 0, 1, 1], [], []>} : vector<8x256xbf16>, vector<256x256xbf16>, vector<8x256xf32> -> vector<8x256xf32>
    %42 = arith.addf %39, %41 : vector<8x256xf32>
    %43 = math.tanh %42 : vector<8x256xf32>
    %c4_i32 = arith.constant 4 : i32
    %44 = arith.index_cast %c4_i32 : i32 to index
    %c0_23 = arith.constant 0 : index
    %c0_24 = arith.constant 0 : index
    %45 = vector.load %arg1[%44, %c0_23, %c0_24] : memref<6x8x256xf32, #tpu.memory_space<vmem>>, vector<1x8x256xf32>
    %46 = vector.shape_cast %45 : vector<1x8x256xf32> to vector<8x256xf32>
    %47 = arith.truncf %43 : vector<8x256xf32> to vector<8x256xbf16>
    %cst_25 = arith.constant dense<0.000000e+00> : vector<8x256xf32>
    %48 = tpu.matmul %47, %14, %cst_25 {dimension_numbers = #tpu.dot_dimension_numbers<[1], [0], [0], [1], [0, 0, 1, 1], [], []>} : vector<8x256xbf16>, vector<256x256xbf16>, vector<8x256xf32> -> vector<8x256xf32>
    %49 = arith.addf %46, %48 : vector<8x256xf32>
    %50 = math.tanh %49 : vector<8x256xf32>
    %c5_i32 = arith.constant 5 : i32
    %51 = arith.index_cast %c5_i32 : i32 to index
    %c0_26 = arith.constant 0 : index
    %c0_27 = arith.constant 0 : index
    %52 = vector.load %arg1[%51, %c0_26, %c0_27] : memref<6x8x256xf32, #tpu.memory_space<vmem>>, vector<1x8x256xf32>
    %53 = vector.shape_cast %52 : vector<1x8x256xf32> to vector<8x256xf32>
    %54 = arith.truncf %50 : vector<8x256xf32> to vector<8x256xbf16>
    %cst_28 = arith.constant dense<0.000000e+00> : vector<8x256xf32>
    %55 = tpu.matmul %54, %14, %cst_28 {dimension_numbers = #tpu.dot_dimension_numbers<[1], [0], [0], [1], [0, 0, 1, 1], [], []>} : vector<8x256xbf16>, vector<256x256xbf16>, vector<8x256xf32> -> vector<8x256xf32>
    %56 = arith.addf %53, %55 : vector<8x256xf32>
    %57 = math.tanh %56 : vector<8x256xf32>
    %c6_i32 = arith.constant 6 : i32
    %58 = arith.truncf %57 : vector<8x256xf32> to vector<8x256xbf16>
    %c0_29 = arith.constant 0 : index
    %c0_30 = arith.constant 0 : index
    %59 = vector.load %arg7[%c0_29, %c0_30] : memref<256x256xbf16, #tpu.memory_space<vmem>>, vector<256x256xbf16>
    %cst_31 = arith.constant dense<0.000000e+00> : vector<8x256xf32>
    %60 = tpu.matmul %58, %59, %cst_31 {dimension_numbers = #tpu.dot_dimension_numbers<[1], [0], [0], [1], [0, 0, 1, 1], [], []>} : vector<8x256xbf16>, vector<256x256xbf16>, vector<8x256xf32> -> vector<8x256xf32>
    %c0_32 = arith.constant 0 : index
    %c0_33 = arith.constant 0 : index
    %61 = vector.load %arg8[%c0_32, %c0_33] : memref<1x256xf32, #tpu.memory_space<vmem>>, vector<1x256xf32>
    %62 = vector.broadcast %61 : vector<1x256xf32> to vector<8x256xf32>
    %63 = arith.addf %60, %62 : vector<8x256xf32>
    %64 = arith.mulf %63, %13 : vector<8x256xf32>
    %65 = arith.truncf %64 : vector<8x256xf32> to vector<8x256xbf16>
    %c0_34 = arith.constant 0 : index
    %c0_35 = arith.constant 0 : index
    %66 = vector.load %arg9[%c0_34, %c0_35] : memref<256x256xbf16, #tpu.memory_space<vmem>>, vector<256x256xbf16>
    %cst_36 = arith.constant dense<0.000000e+00> : vector<8x256xf32>
    %67 = tpu.matmul %65, %66, %cst_36 {dimension_numbers = #tpu.dot_dimension_numbers<[1], [0], [0], [1], [0, 0, 1, 1], [], []>} : vector<8x256xbf16>, vector<256x256xbf16>, vector<8x256xf32> -> vector<8x256xf32>
    %c0_37 = arith.constant 0 : index
    %c0_38 = arith.constant 0 : index
    %68 = vector.load %arg10[%c0_37, %c0_38] : memref<1x256xf32, #tpu.memory_space<vmem>>, vector<1x256xf32>
    %69 = vector.broadcast %68 : vector<1x256xf32> to vector<8x256xf32>
    %70 = arith.addf %67, %69 : vector<8x256xf32>
    %c0_39 = arith.constant 0 : index
    %c0_40 = arith.constant 0 : index
    %71 = vector.load %arg11[%c0_39, %c0_40] : memref<8x256xf32, #tpu.memory_space<vmem>>, vector<8x256xf32>
    tpu.vector_store %arg11[%c0_39, %c0_40], %70 {strides = array<i32>} : memref<8x256xf32, #tpu.memory_space<vmem>>, vector<8x256xf32>,
    return
  }
  func.func @transform_0(%arg0: i32) -> (i32, i32, i32) {
    %c0_i32 = arith.constant 0 : i32
    %c0_i32_0 = arith.constant 0 : i32
    %c0_i32_1 = arith.constant 0 : i32
    return %c0_i32, %arg0, %c0_i32_0 : i32, i32, i32
  }
  func.func @transform_1(%arg0: i32) -> (i32, i32) {
    %c0_i32 = arith.constant 0 : i32
    %c0_i32_0 = arith.constant 0 : i32
    return %arg0, %c0_i32 : i32, i32
  }
  func.func @transform_2(%arg0: i32) -> (i32, i32) {
    %c0_i32 = arith.constant 0 : i32
    %c0_i32_0 = arith.constant 0 : i32
    return %arg0, %c0_i32 : i32, i32
  }
  func.func @transform_3(%arg0: i32) -> (i32, i32) {
    %c0_i32 = arith.constant 0 : i32
    %c0_i32_0 = arith.constant 0 : i32
    %c0_i32_1 = arith.constant 0 : i32
    return %c0_i32, %c0_i32_0 : i32, i32
  }
  func.func @transform_4(%arg0: i32) -> (i32, i32) {
    %c0_i32 = arith.constant 0 : i32
    %c0_i32_0 = arith.constant 0 : i32
    %c0_i32_1 = arith.constant 0 : i32
    return %c0_i32, %c0_i32_0 : i32, i32
  }
  func.func @transform_5(%arg0: i32) -> (i32, i32) {
    %c0_i32 = arith.constant 0 : i32
    %c0_i32_0 = arith.constant 0 : i32
    %c0_i32_1 = arith.constant 0 : i32
    return %c0_i32, %c0_i32_0 : i32, i32
  }
  func.func @transform_6(%arg0: i32) -> (i32, i32) {
    %c0_i32 = arith.constant 0 : i32
    %c0_i32_0 = arith.constant 0 : i32
    %c0_i32_1 = arith.constant 0 : i32
    return %c0_i32, %c0_i32_0 : i32, i32
  }
  func.func @transform_7(%arg0: i32) -> (i32, i32) {
    %c0_i32 = arith.constant 0 : i32
    %c0_i32_0 = arith.constant 0 : i32
    %c0_i32_1 = arith.constant 0 : i32
    return %c0_i32, %c0_i32_0 : i32, i32
  }
  func.func @transform_8(%arg0: i32) -> (i32, i32) {
    %c0_i32 = arith.constant 0 : i32
    %c0_i32_0 = arith.constant 0 : i32
    %c0_i32_1 = arith.constant 0 : i32
    return %c0_i32, %c0_i32_0 : i32, i32
  }
  func.func @transform_9(%arg0: i32) -> (i32, i32) {
    %c0_i32 = arith.constant 0 : i32
    %c0_i32_0 = arith.constant 0 : i32
    %c0_i32_1 = arith.constant 0 : i32
    return %c0_i32, %c0_i32_0 : i32, i32
  }
  func.func @transform_10(%arg0: i32) -> (i32, i32) {
    %c0_i32 = arith.constant 0 : i32
    %c0_i32_0 = arith.constant 0 : i32
    return %arg0, %c0_i32 : i32, i32
  }
}

</mosaic_0001>

<llo_original>
// kernel: tpu_custom_call.1
$region0: #{tpu_custom_call.1}
  #allocation0 [shape = 'u32[]', space=smem, size = 0x4, offset = 0x4, fixed_abs, tag = 'smem constant byte address 0x4 - core index']
  #allocation1 [shape = 'u32[144,128]{1,0:T(1,128)}', space=vmem, size = 0x12000, scoped, tag = 'internal scratch']
  %s0 = inlined_call_operand.hbm [shape: f32[6,8,256], index: 0, kind: input, shape index: {}]
  %s1 = inlined_call_operand.hbm [shape: bf16[8,1024], index: 1, kind: input, shape index: {}]
  %s2 = inlined_call_operand.vmem [shape: f32[8,1], index: 2, kind: input, shape index: {}]
  %s3 = inlined_call_operand.hbm [shape: bf16[1024,256], index: 3, kind: input, shape index: {}]
  %s4 = inlined_call_operand.vmem [shape: f32[1,256], index: 4, kind: input, shape index: {}]
  %s5 = inlined_call_operand.hbm [shape: bf16[256,256], index: 5, kind: input, shape index: {}]
  %s6 = inlined_call_operand.hbm [shape: bf16[256,256], index: 6, kind: input, shape index: {}]
  %s7 = inlined_call_operand.vmem [shape: f32[1,256], index: 7, kind: input, shape index: {}]
  %s8 = inlined_call_operand.hbm [shape: bf16[256,256], index: 8, kind: input, shape index: {}]
  %s9 = inlined_call_operand.vmem [shape: f32[1,256], index: 9, kind: input, shape index: {}]
  %s10 = inlined_call_operand.hbm [shape: f32[8,256], index: 10, kind: output, shape index: {}]
  %s11 = sld [smem:[#allocation0]]
  $region74: #{tpu_custom_call.1} parent=0
    _
  %s13 = ssub.s32 1, %s11
  %s14 = scalar_select 0, %s13, %s11
  $region1: #{tpu_custom_call.1} parent=0
    #allocation2 [shape = 'u8[49152]{0}', space=vmem, size = 0xc000, scoped, tag = 'input window, operand 0, single buffered']
    #allocation3 [shape = 's32[1]{0}', space=sflag, size = 0x4, scoped, tag = 'scoped memory for tpu_custom_call.1']
    #allocation4 [shape = 's32[1]{0}', space=sflag, size = 0x4, scoped, tag = 'scoped memory for tpu_custom_call.1']
    #allocation5 [shape = 'u8[16384]{0}', space=vmem, size = 0x4000, scoped, tag = 'input window, operand 1, single buffered']
    #allocation6 [shape = 's32[1]{0}', space=sflag, size = 0x4, scoped, tag = 'scoped memory for tpu_custom_call.1']
    #allocation7 [shape = 'u8[524288]{0}', space=vmem, size = 0x80000, scoped, tag = 'input window, operand 3, single buffered']
    #allocation8 [shape = 'u8[131072]{0}', space=vmem, size = 0x20000, scoped, tag = 'input window, operand 5, single buffered']
    #allocation9 [shape = 's32[1]{0}', space=sflag, size = 0x4, scoped, tag = 'scoped memory for tpu_custom_call.1']
    #allocation10 [shape = 'u8[131072]{0}', space=vmem, size = 0x20000, scoped, tag = 'input window, operand 6, single buffered']
    #allocation11 [shape = 'u8[131072]{0}', space=vmem, size = 0x20000, scoped, tag = 'input window, operand 8, single buffered']
    #allocation12 [shape = 's32[1]{0}', space=sflag, size = 0x4, scoped, tag = 'scoped memory for tpu_custom_call.1']
    #allocation13 [shape = 'u8[8192]{0}', space=vmem, size = 0x2000, scoped, tag = 'output window, operand 0, single buffered']
    %15 = vsyncpa [#allocation3], 0
    %16 = vsyncpa [#allocation6], 0
    %17 = vsyncpa [#allocation9], 0
    %18 = vsyncpa [#allocation12], 0
    %19 = vsyncpa [#allocation4], 0
    // Predicated region
    $region2: #{tpu_custom_call.1} parent=1 // pred_check
      _
    $region3: #{tpu_custom_call.1} parent=1 // pred_check_branch
      %21 = sbr.rel (0) target = $region5
    $region4: #{tpu_custom_call.1} parent=1 // pred_region
      %s23 = ssub.s32 1536, 1536
      %24 = vsyncadd [#allocation3], %s23
      %s25 = sshll.u32 [#allocation2], 4
      %s26 = int_to_ptr.vmem [resolvable:$true] %s25
      %31 = dma.hbm_to_vmem [thread:$0]  %s0, 1536, %s26, [#allocation3], 256, 256, 16
    $region5: #{tpu_custom_call.1} parent=1 // pred_fallthru
      _
    // Predicated region
    $region6: #{tpu_custom_call.1} parent=1 // pred_check
      _
    $region7: #{tpu_custom_call.1} parent=1 // pred_check_branch
      %33 = sbr.rel (0) target = $region9
    $region8: #{tpu_custom_call.1} parent=1 // pred_region
      %s35 = ssub.s32 512, 512
      %36 = vsyncadd [#allocation6], %s35
      %s38 = sshll.u32 [#allocation5], 4
      %s39 = int_to_ptr.vmem [resolvable:$true] %s38
      %41 = dma.hbm_to_vmem [thread:$0]  %s1, 512, %s39, [#allocation6]
    $region9: #{tpu_custom_call.1} parent=1 // pred_fallthru
      _
    // Predicated region
    $region10: #{tpu_custom_call.1} parent=1 // pred_check
      _
    $region11: #{tpu_custom_call.1} parent=1 // pred_check_branch
      %43 = sbr.rel (0) target = $region13
    $region12: #{tpu_custom_call.1} parent=1 // pred_region
      _
    $region13: #{tpu_custom_call.1} parent=1 // pred_fallthru
      _
    // Predicated region
    $region14: #{tpu_custom_call.1} parent=1 // pred_check
      _
    $region15: #{tpu_custom_call.1} parent=1 // pred_check_branch
      %45 = sbr.rel (0) target = $region17
    $region16: #{tpu_custom_call.1} parent=1 // pred_region
      %s47 = ssub.s32 16384, 16384
      %48 = vsyncadd [#allocation6], %s47
      %s49 = sshll.u32 [#allocation7], 4
      %s50 = int_to_ptr.vmem [resolvable:$true] %s49
      %55 = dma.hbm_to_vmem [thread:$0]  %s3, 16384, %s50, [#allocation6], 128, 128, 8
    $region17: #{tpu_custom_call.1} parent=1 // pred_fallthru
      _
    // Predicated region
    $region18: #{tpu_custom_call.1} parent=1 // pred_check
      _
    $region19: #{tpu_custom_call.1} parent=1 // pred_check_branch
      %57 = sbr.rel (0) target = $region21
    $region20: #{tpu_custom_call.1} parent=1 // pred_region
      _
    $region21: #{tpu_custom_call.1} parent=1 // pred_fallthru
      _
    // Predicated region
    $region22: #{tpu_custom_call.1} parent=1 // pred_check
      _
    $region23: #{tpu_custom_call.1} parent=1 // pred_check_branch
      %59 = sbr.rel (0) target = $region25
    $region24: #{tpu_custom_call.1} parent=1 // pred_region
      %s61 = ssub.s32 4096, 4096
      %62 = vsyncadd [#allocation9], %s61
      %s63 = sshll.u32 [#allocation8], 4
      %s64 = int_to_ptr.vmem [resolvable:$true] %s63
      %69 = dma.hbm_to_vmem [thread:$0]  %s5, 4096, %s64, [#allocation9], 128, 128, 8
    $region25: #{tpu_custom_call.1} parent=1 // pred_fallthru
      _
    // Predicated region
    $region26: #{tpu_custom_call.1} parent=1 // pred_check
      _
    $region27: #{tpu_custom_call.1} parent=1 // pred_check_branch
      %71 = sbr.rel (0) target = $region29
    $region28: #{tpu_custom_call.1} parent=1 // pred_region
      %s73 = ssub.s32 4096, 4096
      %74 = vsyncadd [#allocation9], %s73
      %s75 = sshll.u32 [#allocation10], 4
      %s76 = int_to_ptr.vmem [resolvable:$true] %s75
      %81 = dma.hbm_to_vmem [thread:$0]  %s6, 4096, %s76, [#allocation9], 128, 128, 8
    $region29: #{tpu_custom_call.1} parent=1 // pred_fallthru
      _
    // Predicated region
    $region30: #{tpu_custom_call.1} parent=1 // pred_check
      _
    $region31: #{tpu_custom_call.1} parent=1 // pred_check_branch
      %83 = sbr.rel (0) target = $region33
    $region32: #{tpu_custom_call.1} parent=1 // pred_region
      _
    $region33: #{tpu_custom_call.1} parent=1 // pred_fallthru
      _
    // Predicated region
    $region34: #{tpu_custom_call.1} parent=1 // pred_check
      _
    $region35: #{tpu_custom_call.1} parent=1 // pred_check_branch
      %85 = sbr.rel (0) target = $region37
    $region36: #{tpu_custom_call.1} parent=1 // pred_region
      %s87 = ssub.s32 4096, 4096
      %88 = vsyncadd [#allocation12], %s87
      %s89 = sshll.u32 [#allocation11], 4
      %s90 = int_to_ptr.vmem [resolvable:$true] %s89
      %95 = dma.hbm_to_vmem [thread:$0]  %s8, 4096, %s90, [#allocation12], 128, 128, 8
    $region37: #{tpu_custom_call.1} parent=1 // pred_fallthru
      _
    // Predicated region
    $region38: #{tpu_custom_call.1} parent=1 // pred_check
      _
    $region39: #{tpu_custom_call.1} parent=1 // pred_check_branch
      %97 = sbr.rel (0) target = $region41
    $region40: #{tpu_custom_call.1} parent=1 // pred_region
      _
    $region41: #{tpu_custom_call.1} parent=1 // pred_fallthru
      _
    // Predicated region
    $region42: #{tpu_custom_call.1} parent=1 // pred_check
      _
    $region43: #{tpu_custom_call.1} parent=1 // pred_check_branch
      %99 = sbr.rel (0) target = $region45
    $region44: #{tpu_custom_call.1} parent=1 // pred_region
      %100 = dma.done [#allocation3], 1536
    $region45: #{tpu_custom_call.1} parent=1 // pred_fallthru
      _
    // Predicated region
    $region46: #{tpu_custom_call.1} parent=1 // pred_check
      _
    $region47: #{tpu_custom_call.1} parent=1 // pred_check_branch
      %102 = sbr.rel (0) target = $region49
    $region48: #{tpu_custom_call.1} parent=1 // pred_region
      %103 = dma.done [#allocation6], 512
    $region49: #{tpu_custom_call.1} parent=1 // pred_fallthru
      _
    // Predicated region
    $region50: #{tpu_custom_call.1} parent=1 // pred_check
      _
    $region51: #{tpu_custom_call.1} parent=1 // pred_check_branch
      %105 = sbr.rel (0) target = $region53
    $region52: #{tpu_custom_call.1} parent=1 // pred_region
      %106 = dma.done [#allocation6], 16384
    $region53: #{tpu_custom_call.1} parent=1 // pred_fallthru
      _
    // Predicated region
    $region54: #{tpu_custom_call.1} parent=1 // pred_check
      _
    $region55: #{tpu_custom_call.1} parent=1 // pred_check_branch
      %108 = sbr.rel (0) target = $region57
    $region56: #{tpu_custom_call.1} parent=1 // pred_region
      %109 = dma.done [#allocation9], 4096
    $region57: #{tpu_custom_call.1} parent=1 // pred_fallthru
      _
    // Predicated region
    $region58: #{tpu_custom_call.1} parent=1 // pred_check
      _
    $region59: #{tpu_custom_call.1} parent=1 // pred_check_branch
      %111 = sbr.rel (0) target = $region61
    $region60: #{tpu_custom_call.1} parent=1 // pred_region
      %112 = dma.done [#allocation9], 4096
    $region61: #{tpu_custom_call.1} parent=1 // pred_fallthru
      _
    // Predicated region
    $region62: #{tpu_custom_call.1} parent=1 // pred_check
      _
    $region63: #{tpu_custom_call.1} parent=1 // pred_check_branch
      %114 = sbr.rel (0) target = $region65
    $region64: #{tpu_custom_call.1} parent=1 // pred_region
      %115 = dma.done [#allocation12], 4096
    $region65: #{tpu_custom_call.1} parent=1 // pred_fallthru
      _
    %v117 = vld [vmem:[#allocation5] sm:$0xff]
    %v118 = vld [vmem:[#allocation5 + $0x8] sm:$0xff]
    %v119 = vld [vmem:[#allocation5 + $0x10] sm:$0xff]
    %v120 = vld [vmem:[#allocation5 + $0x18] sm:$0xff]
    %v121 = vld [vmem:[#allocation7] sm:$0xff]
    %v122 = vld [vmem:[#allocation7 + $0x8] sm:$0xff]
    %v123 = vld [vmem:[#allocation7 + $0x10] sm:$0xff]
    %v124 = vld [vmem:[#allocation7 + $0x18] sm:$0xff]
    %v125 = vld [vmem:[#allocation7 + $0x20] sm:$0xff]
    %v126 = vld [vmem:[#allocation7 + $0x28] sm:$0xff]
    %v127 = vld [vmem:[#allocation7 + $0x30] sm:$0xff]
    %v128 = vld [vmem:[#allocation7 + $0x38] sm:$0xff]
    %v129 = vld [vmem:[#allocation7 + $0x40] sm:$0xff]
    %v130 = vld [vmem:[#allocation7 + $0x48] sm:$0xff]
    %v131 = vld [vmem:[#allocation7 + $0x50] sm:$0xff]
    %v132 = vld [vmem:[#allocation7 + $0x58] sm:$0xff]
    %v133 = vld [vmem:[#allocation7 + $0x60] sm:$0xff]
    %v134 = vld [vmem:[#allocation7 + $0x68] sm:$0xff]
    %v135 = vld [vmem:[#allocation7 + $0x70] sm:$0xff]
    %v136 = vld [vmem:[#allocation7 + $0x78] sm:$0xff]
    %v137 = vld [vmem:[#allocation7 + $0x80] sm:$0xff]
    %v138 = vld [vmem:[#allocation7 + $0x88] sm:$0xff]
    %v139 = vld [vmem:[#allocation7 + $0x90] sm:$0xff]
    %v140 = vld [vmem:[#allocation7 + $0x98] sm:$0xff]
    %v141 = vld [vmem:[#allocation7 + $0xa0] sm:$0xff]
    %v142 = vld [vmem:[#allocation7 + $0xa8] sm:$0xff]
    %v143 = vld [vmem:[#allocation7 + $0xb0] sm:$0xff]
    %v144 = vld [vmem:[#allocation7 + $0xb8] sm:$0xff]
    %v145 = vld [vmem:[#allocation7 + $0xc0] sm:$0xff]
    %v146 = vld [vmem:[#allocation7 + $0xc8] sm:$0xff]
    %v147 = vld [vmem:[#allocation7 + $0xd0] sm:$0xff]
    %v148 = vld [vmem:[#allocation7 + $0xd8] sm:$0xff]
    %v149 = vld [vmem:[#allocation7 + $0xe0] sm:$0xff]
    %v150 = vld [vmem:[#allocation7 + $0xe8] sm:$0xff]
    %v151 = vld [vmem:[#allocation7 + $0xf0] sm:$0xff]
    %v152 = vld [vmem:[#allocation7 + $0xf8] sm:$0xff]
    %v153 = vld [vmem:[#allocation7 + $0x100] sm:$0xff]
    %v154 = vld [vmem:[#allocation7 + $0x108] sm:$0xff]
    %v155 = vld [vmem:[#allocation7 + $0x110] sm:$0xff]
    %v156 = vld [vmem:[#allocation7 + $0x118] sm:$0xff]
    %v157 = vld [vmem:[#allocation7 + $0x120] sm:$0xff]
    %v158 = vld [vmem:[#allocation7 + $0x128] sm:$0xff]
    %v159 = vld [vmem:[#allocation7 + $0x130] sm:$0xff]
    %v160 = vld [vmem:[#allocation7 + $0x138] sm:$0xff]
    %v161 = vld [vmem:[#allocation7 + $0x140] sm:$0xff]
    %v162 = vld [vmem:[#allocation7 + $0x148] sm:$0xff]
    %v163 = vld [vmem:[#allocation7 + $0x150] sm:$0xff]
    %v164 = vld [vmem:[#allocation7 + $0x158] sm:$0xff]
    %v165 = vld [vmem:[#allocation7 + $0x160] sm:$0xff]
    %v166 = vld [vmem:[#allocation7 + $0x168] sm:$0xff]
    %v167 = vld [vmem:[#allocation7 + $0x170] sm:$0xff]
    %v168 = vld [vmem:[#allocation7 + $0x178] sm:$0xff]
    %v169 = vld [vmem:[#allocation7 + $0x180] sm:$0xff]
    %v170 = vld [vmem:[#allocation7 + $0x188] sm:$0xff]
    %v171 = vld [vmem:[#allocation7 + $0x190] sm:$0xff]
    %v172 = vld [vmem:[#allocation7 + $0x198] sm:$0xff]
    %v173 = vld [vmem:[#allocation7 + $0x1a0] sm:$0xff]
    %v174 = vld [vmem:[#allocation7 + $0x1a8] sm:$0xff]
    %v175 = vld [vmem:[#allocation7 + $0x1b0] sm:$0xff]
    %v176 = vld [vmem:[#allocation7 + $0x1b8] sm:$0xff]
    %v177 = vld [vmem:[#allocation7 + $0x1c0] sm:$0xff]
    %v178 = vld [vmem:[#allocation7 + $0x1c8] sm:$0xff]
    %v179 = vld [vmem:[#allocation7 + $0x1d0] sm:$0xff]
    %v180 = vld [vmem:[#allocation7 + $0x1d8] sm:$0xff]
    %v181 = vld [vmem:[#allocation7 + $0x1e0] sm:$0xff]
    %v182 = vld [vmem:[#allocation7 + $0x1e8] sm:$0xff]
    %v183 = vld [vmem:[#allocation7 + $0x1f0] sm:$0xff]
    %v184 = vld [vmem:[#allocation7 + $0x1f8] sm:$0xff]
    %v185 = vld [vmem:[#allocation7 + $0x200] sm:$0xff]
    %v186 = vld [vmem:[#allocation7 + $0x208] sm:$0xff]
    %v187 = vld [vmem:[#allocation7 + $0x210] sm:$0xff]
    %v188 = vld [vmem:[#allocation7 + $0x218] sm:$0xff]
    %v189 = vld [vmem:[#allocation7 + $0x220] sm:$0xff]
    %v190 = vld [vmem:[#allocation7 + $0x228] sm:$0xff]
    %v191 = vld [vmem:[#allocation7 + $0x230] sm:$0xff]
    %v192 = vld [vmem:[#allocation7 + $0x238] sm:$0xff]
    %v193 = vld [vmem:[#allocation7 + $0x240] sm:$0xff]
    %v194 = vld [vmem:[#allocation7 + $0x248] sm:$0xff]
    %v195 = vld [vmem:[#allocation7 + $0x250] sm:$0xff]
    %v196 = vld [vmem:[#allocation7 + $0x258] sm:$0xff]
    %v197 = vld [vmem:[#allocation7 + $0x260] sm:$0xff]
    %v198 = vld [vmem:[#allocation7 + $0x268] sm:$0xff]
    %v199 = vld [vmem:[#allocation7 + $0x270] sm:$0xff]
    %v200 = vld [vmem:[#allocation7 + $0x278] sm:$0xff]
    %v201 = vld [vmem:[#allocation7 + $0x280] sm:$0xff]
    %v202 = vld [vmem:[#allocation7 + $0x288] sm:$0xff]
    %v203 = vld [vmem:[#allocation7 + $0x290] sm:$0xff]
    %v204 = vld [vmem:[#allocation7 + $0x298] sm:$0xff]
    %v205 = vld [vmem:[#allocation7 + $0x2a0] sm:$0xff]
    %v206 = vld [vmem:[#allocation7 + $0x2a8] sm:$0xff]
    %v207 = vld [vmem:[#allocation7 + $0x2b0] sm:$0xff]
    %v208 = vld [vmem:[#allocation7 + $0x2b8] sm:$0xff]
    %v209 = vld [vmem:[#allocation7 + $0x2c0] sm:$0xff]
    %v210 = vld [vmem:[#allocation7 + $0x2c8] sm:$0xff]
    %v211 = vld [vmem:[#allocation7 + $0x2d0] sm:$0xff]
    %v212 = vld [vmem:[#allocation7 + $0x2d8] sm:$0xff]
    %v213 = vld [vmem:[#allocation7 + $0x2e0] sm:$0xff]
    %v214 = vld [vmem:[#allocation7 + $0x2e8] sm:$0xff]
    %v215 = vld [vmem:[#allocation7 + $0x2f0] sm:$0xff]
    %v216 = vld [vmem:[#allocation7 + $0x2f8] sm:$0xff]
    %v217 = vld [vmem:[#allocation7 + $0x300] sm:$0xff]
    %v218 = vld [vmem:[#allocation7 + $0x308] sm:$0xff]
    %v219 = vld [vmem:[#allocation7 + $0x310] sm:$0xff]
    %v220 = vld [vmem:[#allocation7 + $0x318] sm:$0xff]
    %v221 = vld [vmem:[#allocation7 + $0x320] sm:$0xff]
    %v222 = vld [vmem:[#allocation7 + $0x328] sm:$0xff]
    %v223 = vld [vmem:[#allocation7 + $0x330] sm:$0xff]
    %v224 = vld [vmem:[#allocation7 + $0x338] sm:$0xff]
    %v225 = vld [vmem:[#allocation7 + $0x340] sm:$0xff]
    %v226 = vld [vmem:[#allocation7 + $0x348] sm:$0xff]
    %v227 = vld [vmem:[#allocation7 + $0x350] sm:$0xff]
    %v228 = vld [vmem:[#allocation7 + $0x358] sm:$0xff]
    %v229 = vld [vmem:[#allocation7 + $0x360] sm:$0xff]
    %v230 = vld [vmem:[#allocation7 + $0x368] sm:$0xff]
    %v231 = vld [vmem:[#allocation7 + $0x370] sm:$0xff]
    %v232 = vld [vmem:[#allocation7 + $0x378] sm:$0xff]
    %v233 = vld [vmem:[#allocation7 + $0x380] sm:$0xff]
    %v234 = vld [vmem:[#allocation7 + $0x388] sm:$0xff]
    %v235 = vld [vmem:[#allocation7 + $0x390] sm:$0xff]
    %v236 = vld [vmem:[#allocation7 + $0x398] sm:$0xff]
    %v237 = vld [vmem:[#allocation7 + $0x3a0] sm:$0xff]
    %v238 = vld [vmem:[#allocation7 + $0x3a8] sm:$0xff]
    %v239 = vld [vmem:[#allocation7 + $0x3b0] sm:$0xff]
    %v240 = vld [vmem:[#allocation7 + $0x3b8] sm:$0xff]
    %v241 = vld [vmem:[#allocation7 + $0x3c0] sm:$0xff]
    %v242 = vld [vmem:[#allocation7 + $0x3c8] sm:$0xff]
    %v243 = vld [vmem:[#allocation7 + $0x3d0] sm:$0xff]
    %v244 = vld [vmem:[#allocation7 + $0x3d8] sm:$0xff]
    %v245 = vld [vmem:[#allocation7 + $0x3e0] sm:$0xff]
    %v246 = vld [vmem:[#allocation7 + $0x3e8] sm:$0xff]
    %v247 = vld [vmem:[#allocation7 + $0x3f0] sm:$0xff]
    %v248 = vld [vmem:[#allocation7 + $0x3f8] sm:$0xff]
    %v253 = vunpack.c.l.b16 %v117
    %v254 = vunpack.c.h.b16 %v117
    %v255 = vunpack.c.l.b16 %v118
    %v256 = vunpack.c.h.b16 %v118
    %v257 = vunpack.c.l.b16 %v119
    %v258 = vunpack.c.h.b16 %v119
    %v259 = vunpack.c.l.b16 %v120
    %v260 = vunpack.c.h.b16 %v120
    %v261 = vpack.c.b16 %v253, %v253
    %v262 = vpack.c.b16 %v254, %v254
    %v263 = vpack.c.b16 %v255, %v255
    %v264 = vpack.c.b16 %v256, %v256
    %v265 = vpack.c.b16 %v257, %v257
    %v266 = vpack.c.b16 %v258, %v258
    %v267 = vpack.c.b16 %v259, %v259
    %v268 = vpack.c.b16 %v260, %v260
    %v405 = vunpack.c.l.b16 %v121
    %v406 = vunpack.c.h.b16 %v121
    %v407 = vunpack.c.l.b16 %v122
    %v408 = vunpack.c.h.b16 %v122
    %v409 = vunpack.c.l.b16 %v123
    %v410 = vunpack.c.h.b16 %v123
    %v411 = vunpack.c.l.b16 %v124
    %v412 = vunpack.c.h.b16 %v124
    %v413 = vunpack.c.l.b16 %v125
    %v414 = vunpack.c.h.b16 %v125
    %v415 = vunpack.c.l.b16 %v126
    %v416 = vunpack.c.h.b16 %v126
    %v417 = vunpack.c.l.b16 %v127
    %v418 = vunpack.c.h.b16 %v127
    %v419 = vunpack.c.l.b16 %v128
    %v420 = vunpack.c.h.b16 %v128
    %v421 = vunpack.c.l.b16 %v129
    %v422 = vunpack.c.h.b16 %v129
    %v423 = vunpack.c.l.b16 %v130
    %v424 = vunpack.c.h.b16 %v130
    %v425 = vunpack.c.l.b16 %v131
    %v426 = vunpack.c.h.b16 %v131
    %v427 = vunpack.c.l.b16 %v132
    %v428 = vunpack.c.h.b16 %v132
    %v429 = vunpack.c.l.b16 %v133
    %v430 = vunpack.c.h.b16 %v133
    %v431 = vunpack.c.l.b16 %v134
    %v432 = vunpack.c.h.b16 %v134
    %v433 = vunpack.c.l.b16 %v135
    %v434 = vunpack.c.h.b16 %v135
    %v435 = vunpack.c.l.b16 %v136
    %v436 = vunpack.c.h.b16 %v136
    %v437 = vunpack.c.l.b16 %v137
    %v438 = vunpack.c.h.b16 %v137
    %v439 = vunpack.c.l.b16 %v138
    %v440 = vunpack.c.h.b16 %v138
    %v441 = vunpack.c.l.b16 %v139
    %v442 = vunpack.c.h.b16 %v139
    %v443 = vunpack.c.l.b16 %v140
    %v444 = vunpack.c.h.b16 %v140
    %v445 = vunpack.c.l.b16 %v141
    %v446 = vunpack.c.h.b16 %v141
    %v447 = vunpack.c.l.b16 %v142
    %v448 = vunpack.c.h.b16 %v142
    %v449 = vunpack.c.l.b16 %v143
    %v450 = vunpack.c.h.b16 %v143
    %v451 = vunpack.c.l.b16 %v144
    %v452 = vunpack.c.h.b16 %v144
    %v453 = vunpack.c.l.b16 %v145
    %v454 = vunpack.c.h.b16 %v145
    %v455 = vunpack.c.l.b16 %v146
    %v456 = vunpack.c.h.b16 %v146
    %v457 = vunpack.c.l.b16 %v147
    %v458 = vunpack.c.h.b16 %v147
    %v459 = vunpack.c.l.b16 %v148
    %v460 = vunpack.c.h.b16 %v148
    %v461 = vunpack.c.l.b16 %v149
    %v462 = vunpack.c.h.b16 %v149
    %v463 = vunpack.c.l.b16 %v150
    %v464 = vunpack.c.h.b16 %v150
    %v465 = vunpack.c.l.b16 %v151
    %v466 = vunpack.c.h.b16 %v151
    %v467 = vunpack.c.l.b16 %v152
    %v468 = vunpack.c.h.b16 %v152
    %v469 = vunpack.c.l.b16 %v153
    %v470 = vunpack.c.h.b16 %v153
    %v471 = vunpack.c.l.b16 %v154
    %v472 = vunpack.c.h.b16 %v154
    %v473 = vunpack.c.l.b16 %v155
    %v474 = vunpack.c.h.b16 %v155
    %v475 = vunpack.c.l.b16 %v156
    %v476 = vunpack.c.h.b16 %v156
    %v477 = vunpack.c.l.b16 %v157
    %v478 = vunpack.c.h.b16 %v157
    %v479 = vunpack.c.l.b16 %v158
    %v480 = vunpack.c.h.b16 %v158
    %v481 = vunpack.c.l.b16 %v159
    %v482 = vunpack.c.h.b16 %v159
    %v483 = vunpack.c.l.b16 %v160
    %v484 = vunpack.c.h.b16 %v160
    %v485 = vunpack.c.l.b16 %v161
    %v486 = vunpack.c.h.b16 %v161
    %v487 = vunpack.c.l.b16 %v162
    %v488 = vunpack.c.h.b16 %v162
    %v489 = vunpack.c.l.b16 %v163
    %v490 = vunpack.c.h.b16 %v163
    %v491 = vunpack.c.l.b16 %v164
    %v492 = vunpack.c.h.b16 %v164
    %v493 = vunpack.c.l.b16 %v165
    %v494 = vunpack.c.h.b16 %v165
    %v495 = vunpack.c.l.b16 %v166
    %v496 = vunpack.c.h.b16 %v166
    %v497 = vunpack.c.l.b16 %v167
    %v498 = vunpack.c.h.b16 %v167
    %v499 = vunpack.c.l.b16 %v168
    %v500 = vunpack.c.h.b16 %v168
    %v501 = vunpack.c.l.b16 %v169
    %v502 = vunpack.c.h.b16 %v169
    %v503 = vunpack.c.l.b16 %v170
    %v504 = vunpack.c.h.b16 %v170
    %v505 = vunpack.c.l.b16 %v171
    %v506 = vunpack.c.h.b16 %v171
    %v507 = vunpack.c.l.b16 %v172
    %v508 = vunpack.c.h.b16 %v172
    %v509 = vunpack.c.l.b16 %v173
    %v510 = vunpack.c.h.b16 %v173
    %v511 = vunpack.c.l.b16 %v174
    %v512 = vunpack.c.h.b16 %v174
    %v513 = vunpack.c.l.b16 %v175
    %v514 = vunpack.c.h.b16 %v175
    %v515 = vunpack.c.l.b16 %v176
    %v516 = vunpack.c.h.b16 %v176
    %v517 = vunpack.c.l.b16 %v177
    %v518 = vunpack.c.h.b16 %v177
    %v519 = vunpack.c.l.b16 %v178
    %v520 = vunpack.c.h.b16 %v178
    %v521 = vunpack.c.l.b16 %v179
    %v522 = vunpack.c.h.b16 %v179
    %v523 = vunpack.c.l.b16 %v180
    %v524 = vunpack.c.h.b16 %v180
    %v525 = vunpack.c.l.b16 %v181
    %v526 = vunpack.c.h.b16 %v181
    %v527 = vunpack.c.l.b16 %v182
    %v528 = vunpack.c.h.b16 %v182
    %v529 = vunpack.c.l.b16 %v183
    %v530 = vunpack.c.h.b16 %v183
    %v531 = vunpack.c.l.b16 %v184
    %v532 = vunpack.c.h.b16 %v184
    %v533 = vunpack.c.l.b16 %v185
    %v534 = vunpack.c.h.b16 %v185
    %v535 = vunpack.c.l.b16 %v186
    %v536 = vunpack.c.h.b16 %v186
    %v537 = vunpack.c.l.b16 %v187
    %v538 = vunpack.c.h.b16 %v187
    %v539 = vunpack.c.l.b16 %v188
    %v540 = vunpack.c.h.b16 %v188
    %v541 = vunpack.c.l.b16 %v189
    %v542 = vunpack.c.h.b16 %v189
    %v543 = vunpack.c.l.b16 %v190
    %v544 = vunpack.c.h.b16 %v190
    %v545 = vunpack.c.l.b16 %v191
    %v546 = vunpack.c.h.b16 %v191
    %v547 = vunpack.c.l.b16 %v192
    %v548 = vunpack.c.h.b16 %v192
    %v549 = vunpack.c.l.b16 %v193
    %v550 = vunpack.c.h.b16 %v193
    %v551 = vunpack.c.l.b16 %v194
    %v552 = vunpack.c.h.b16 %v194
    %v553 = vunpack.c.l.b16 %v195
    %v554 = vunpack.c.h.b16 %v195
    %v555 = vunpack.c.l.b16 %v196
    %v556 = vunpack.c.h.b16 %v196
    %v557 = vunpack.c.l.b16 %v197
    %v558 = vunpack.c.h.b16 %v197
    %v559 = vunpack.c.l.b16 %v198
    %v560 = vunpack.c.h.b16 %v198
    %v561 = vunpack.c.l.b16 %v199
    %v562 = vunpack.c.h.b16 %v199
    %v563 = vunpack.c.l.b16 %v200
    %v564 = vunpack.c.h.b16 %v200
    %v565 = vunpack.c.l.b16 %v201
    %v566 = vunpack.c.h.b16 %v201
    %v567 = vunpack.c.l.b16 %v202
    %v568 = vunpack.c.h.b16 %v202
    %v569 = vunpack.c.l.b16 %v203
    %v570 = vunpack.c.h.b16 %v203
    %v571 = vunpack.c.l.b16 %v204
    %v572 = vunpack.c.h.b16 %v204
    %v573 = vunpack.c.l.b16 %v205
    %v574 = vunpack.c.h.b16 %v205
    %v575 = vunpack.c.l.b16 %v206
    %v576 = vunpack.c.h.b16 %v206
    %v577 = vunpack.c.l.b16 %v207
    %v578 = vunpack.c.h.b16 %v207
    %v579 = vunpack.c.l.b16 %v208
    %v580 = vunpack.c.h.b16 %v208
    %v581 = vunpack.c.l.b16 %v209
    %v582 = vunpack.c.h.b16 %v209
    %v583 = vunpack.c.l.b16 %v210
    %v584 = vunpack.c.h.b16 %v210
    %v585 = vunpack.c.l.b16 %v211
    %v586 = vunpack.c.h.b16 %v211
    %v587 = vunpack.c.l.b16 %v212
    %v588 = vunpack.c.h.b16 %v212
    %v589 = vunpack.c.l.b16 %v213
    %v590 = vunpack.c.h.b16 %v213
    %v591 = vunpack.c.l.b16 %v214
    %v592 = vunpack.c.h.b16 %v214
    %v593 = vunpack.c.l.b16 %v215
    %v594 = vunpack.c.h.b16 %v215
    %v595 = vunpack.c.l.b16 %v216
    %v596 = vunpack.c.h.b16 %v216
    %v597 = vunpack.c.l.b16 %v217
    %v598 = vunpack.c.h.b16 %v217
    %v599 = vunpack.c.l.b16 %v218
    %v600 = vunpack.c.h.b16 %v218
    %v601 = vunpack.c.l.b16 %v219
    %v602 = vunpack.c.h.b16 %v219
    %v603 = vunpack.c.l.b16 %v220
    %v604 = vunpack.c.h.b16 %v220
    %v605 = vunpack.c.l.b16 %v221
    %v606 = vunpack.c.h.b16 %v221
    %v607 = vunpack.c.l.b16 %v222
    %v608 = vunpack.c.h.b16 %v222
    %v609 = vunpack.c.l.b16 %v223
    %v610 = vunpack.c.h.b16 %v223
    %v611 = vunpack.c.l.b16 %v224
    %v612 = vunpack.c.h.b16 %v224
    %v613 = vunpack.c.l.b16 %v225
    %v614 = vunpack.c.h.b16 %v225
    %v615 = vunpack.c.l.b16 %v226
    %v616 = vunpack.c.h.b16 %v226
    %v617 = vunpack.c.l.b16 %v227
    %v618 = vunpack.c.h.b16 %v227
    %v619 = vunpack.c.l.b16 %v228
    %v620 = vunpack.c.h.b16 %v228
    %v621 = vunpack.c.l.b16 %v229
    %v622 = vunpack.c.h.b16 %v229
    %v623 = vunpack.c.l.b16 %v230
    %v624 = vunpack.c.h.b16 %v230
    %v625 = vunpack.c.l.b16 %v231
    %v626 = vunpack.c.h.b16 %v231
    %v627 = vunpack.c.l.b16 %v232
    %v628 = vunpack.c.h.b16 %v232
    %v629 = vunpack.c.l.b16 %v233
    %v630 = vunpack.c.h.b16 %v233
    %v631 = vunpack.c.l.b16 %v234
    %v632 = vunpack.c.h.b16 %v234
    %v633 = vunpack.c.l.b16 %v235
    %v634 = vunpack.c.h.b16 %v235
    %v635 = vunpack.c.l.b16 %v236
    %v636 = vunpack.c.h.b16 %v236
    %v637 = vunpack.c.l.b16 %v237
    %v638 = vunpack.c.h.b16 %v237
    %v639 = vunpack.c.l.b16 %v238
    %v640 = vunpack.c.h.b16 %v238
    %v641 = vunpack.c.l.b16 %v239
    %v642 = vunpack.c.h.b16 %v239
    %v643 = vunpack.c.l.b16 %v240
    %v644 = vunpack.c.h.b16 %v240
    %v645 = vunpack.c.l.b16 %v241
    %v646 = vunpack.c.h.b16 %v241
    %v647 = vunpack.c.l.b16 %v242
    %v648 = vunpack.c.h.b16 %v242
    %v649 = vunpack.c.l.b16 %v243
    %v650 = vunpack.c.h.b16 %v243
    %v651 = vunpack.c.l.b16 %v244
    %v652 = vunpack.c.h.b16 %v244
    %v653 = vunpack.c.l.b16 %v245
    %v654 = vunpack.c.h.b16 %v245
    %v655 = vunpack.c.l.b16 %v246
    %v656 = vunpack.c.h.b16 %v246
    %v657 = vunpack.c.l.b16 %v247
    %v658 = vunpack.c.h.b16 %v247
    %v659 = vunpack.c.l.b16 %v248
    %v660 = vunpack.c.h.b16 %v248
    %v661 = vpack.c.b16 %v407, %v405
    %v662 = vpack.c.b16 %v408, %v406
    %v663 = vpack.c.b16 %v411, %v409
    %v664 = vpack.c.b16 %v412, %v410
    %v665 = vpack.c.b16 %v415, %v413
    %v666 = vpack.c.b16 %v416, %v414
    %v667 = vpack.c.b16 %v419, %v417
    %v668 = vpack.c.b16 %v420, %v418
    %v669 = vpack.c.b16 %v423, %v421
    %v670 = vpack.c.b16 %v424, %v422
    %v671 = vpack.c.b16 %v427, %v425
    %v672 = vpack.c.b16 %v428, %v426
    %v673 = vpack.c.b16 %v431, %v429
    %v674 = vpack.c.b16 %v432, %v430
    %v675 = vpack.c.b16 %v435, %v433
    %v676 = vpack.c.b16 %v436, %v434
    %v677 = vpack.c.b16 %v439, %v437
    %v678 = vpack.c.b16 %v440, %v438
    %v679 = vpack.c.b16 %v443, %v441
    %v680 = vpack.c.b16 %v444, %v442
    %v681 = vpack.c.b16 %v447, %v445
    %v682 = vpack.c.b16 %v448, %v446
    %v683 = vpack.c.b16 %v451, %v449
    %v684 = vpack.c.b16 %v452, %v450
    %v685 = vpack.c.b16 %v455, %v453
    %v686 = vpack.c.b16 %v456, %v454
    %v687 = vpack.c.b16 %v459, %v457
    %v688 = vpack.c.b16 %v460, %v458
    %v689 = vpack.c.b16 %v463, %v461
    %v690 = vpack.c.b16 %v464, %v462
    %v691 = vpack.c.b16 %v467, %v465
    %v692 = vpack.c.b16 %v468, %v466
    %v693 = vpack.c.b16 %v471, %v469
    %v694 = vpack.c.b16 %v472, %v470
    %v695 = vpack.c.b16 %v475, %v473
    %v696 = vpack.c.b16 %v476, %v474
    %v697 = vpack.c.b16 %v479, %v477
    %v698 = vpack.c.b16 %v480, %v478
    %v699 = vpack.c.b16 %v483, %v481
    %v700 = vpack.c.b16 %v484, %v482
    %v701 = vpack.c.b16 %v487, %v485
    %v702 = vpack.c.b16 %v488, %v486
    %v703 = vpack.c.b16 %v491, %v489
    %v704 = vpack.c.b16 %v492, %v490
    %v705 = vpack.c.b16 %v495, %v493
    %v706 = vpack.c.b16 %v496, %v494
    %v707 = vpack.c.b16 %v499, %v497
    %v708 = vpack.c.b16 %v500, %v498
    %v709 = vpack.c.b16 %v503, %v501
    %v710 = vpack.c.b16 %v504, %v502
    %v711 = vpack.c.b16 %v507, %v505
    %v712 = vpack.c.b16 %v508, %v506
    %v713 = vpack.c.b16 %v511, %v509
    %v714 = vpack.c.b16 %v512, %v510
    %v715 = vpack.c.b16 %v515, %v513
    %v716 = vpack.c.b16 %v516, %v514
    %v717 = vpack.c.b16 %v519, %v517
    %v718 = vpack.c.b16 %v520, %v518
    %v719 = vpack.c.b16 %v523, %v521
    %v720 = vpack.c.b16 %v524, %v522
    %v721 = vpack.c.b16 %v527, %v525
    %v722 = vpack.c.b16 %v528, %v526
    %v723 = vpack.c.b16 %v531, %v529
    %v724 = vpack.c.b16 %v532, %v530
    %v725 = vpack.c.b16 %v535, %v533
    %v726 = vpack.c.b16 %v536, %v534
    %v727 = vpack.c.b16 %v539, %v537
    %v728 = vpack.c.b16 %v540, %v538
    %v729 = vpack.c.b16 %v543, %v541
    %v730 = vpack.c.b16 %v544, %v542
    %v731 = vpack.c.b16 %v547, %v545
    %v732 = vpack.c.b16 %v548, %v546
    %v733 = vpack.c.b16 %v551, %v549
    %v734 = vpack.c.b16 %v552, %v550
    %v735 = vpack.c.b16 %v555, %v553
    %v736 = vpack.c.b16 %v556, %v554
    %v737 = vpack.c.b16 %v559, %v557
    %v738 = vpack.c.b16 %v560, %v558
    %v739 = vpack.c.b16 %v563, %v561
    %v740 = vpack.c.b16 %v564, %v562
    %v741 = vpack.c.b16 %v567, %v565
    %v742 = vpack.c.b16 %v568, %v566
    %v743 = vpack.c.b16 %v571, %v569
    %v744 = vpack.c.b16 %v572, %v570
    %v745 = vpack.c.b16 %v575, %v573
    %v746 = vpack.c.b16 %v576, %v574
    %v747 = vpack.c.b16 %v579, %v577
    %v748 = vpack.c.b16 %v580, %v578
    %v749 = vpack.c.b16 %v583, %v581
    %v750 = vpack.c.b16 %v584, %v582
    %v751 = vpack.c.b16 %v587, %v585
    %v752 = vpack.c.b16 %v588, %v586
    %v753 = vpack.c.b16 %v591, %v589
    %v754 = vpack.c.b16 %v592, %v590
    %v755 = vpack.c.b16 %v595, %v593
    %v756 = vpack.c.b16 %v596, %v594
    %v757 = vpack.c.b16 %v599, %v597
    %v758 = vpack.c.b16 %v600, %v598
    %v759 = vpack.c.b16 %v603, %v601
    %v760 = vpack.c.b16 %v604, %v602
    %v761 = vpack.c.b16 %v607, %v605
    %v762 = vpack.c.b16 %v608, %v606
    %v763 = vpack.c.b16 %v611, %v609
    %v764 = vpack.c.b16 %v612, %v610
    %v765 = vpack.c.b16 %v615, %v613
    %v766 = vpack.c.b16 %v616, %v614
    %v767 = vpack.c.b16 %v619, %v617
    %v768 = vpack.c.b16 %v620, %v618
    %v769 = vpack.c.b16 %v623, %v621
    %v770 = vpack.c.b16 %v624, %v622
    %v771 = vpack.c.b16 %v627, %v625
    %v772 = vpack.c.b16 %v628, %v626
    %v773 = vpack.c.b16 %v631, %v629
    %v774 = vpack.c.b16 %v632, %v630
    %v775 = vpack.c.b16 %v635, %v633
    %v776 = vpack.c.b16 %v636, %v634
    %v777 = vpack.c.b16 %v639, %v637
    %v778 = vpack.c.b16 %v640, %v638
    %v779 = vpack.c.b16 %v643, %v641
    %v780 = vpack.c.b16 %v644, %v642
    %v781 = vpack.c.b16 %v647, %v645
    %v782 = vpack.c.b16 %v648, %v646
    %v783 = vpack.c.b16 %v651, %v649
    %v784 = vpack.c.b16 %v652, %v650
    %v785 = vpack.c.b16 %v655, %v653
    %v786 = vpack.c.b16 %v656, %v654
    %v787 = vpack.c.b16 %v659, %v657
    %v788 = vpack.c.b16 %v660, %v658
    %917 = vmatprep.subr.bf16.mxu0 %v662
    %918 = vmatpush1.bf16.msra.mxu0 %v661
    %919 = vmatprep.subr.bf16.mxu0 %v664
    %920 = vmatpush1.bf16.msra.mxu0 %v663
    %921 = vmatprep.subr.bf16.mxu0 %v666
    %922 = vmatpush1.bf16.msra.mxu0 %v665
    %923 = vmatprep.subr.bf16.mxu0 %v668
    %924 = vmatpush1.bf16.msra.mxu0 %v667
    %925 = vmatprep.subr.bf16.mxu0 %v670
    %926 = vmatpush1.bf16.msra.mxu0 %v669
    %927 = vmatprep.subr.bf16.mxu0 %v672
    %928 = vmatpush1.bf16.msra.mxu0 %v671
    %929 = vmatprep.subr.bf16.mxu0 %v674
    %930 = vmatpush1.bf16.msra.mxu0 %v673
    %931 = vmatprep.subr.bf16.mxu0 %v676
    %932 = vmatpush1.bf16.msra.mxu0 %v675
    %933 = vmatprep.subr.bf16.mxu0 %v678
    %934 = vmatpush1.bf16.msra.mxu0 %v677
    %935 = vmatprep.subr.bf16.mxu0 %v680
    %936 = vmatpush1.bf16.msra.mxu0 %v679
    %937 = vmatprep.subr.bf16.mxu0 %v682
    %938 = vmatpush1.bf16.msra.mxu0 %v681
    %939 = vmatprep.subr.bf16.mxu0 %v684
    %940 = vmatpush1.bf16.msra.mxu0 %v683
    %941 = vmatprep.subr.bf16.mxu0 %v686
    %942 = vmatpush1.bf16.msra.mxu0 %v685
    %943 = vmatprep.subr.bf16.mxu0 %v688
    %944 = vmatpush1.bf16.msra.mxu0 %v687
    %945 = vmatprep.subr.bf16.mxu0 %v690
    %946 = vmatpush1.bf16.msra.mxu0 %v689
    %947 = vmatprep.subr.bf16.mxu0 %v692
    %948 = vmatpush1.bf16.msra.mxu0 %v691
    %949 = vmatprep.mubr.bf16.mxu0 %v262
    %950 = vmatmul.mubr.bf16.gmra.mrb[0].mxu0 %v261
    %v951 = vpop.f32.mrb[0].mxu0
    %v952 = vadd.f32 0.0, %v951
    %v953 = vpop.f32.mrb[0].mxu0
    %v954 = vadd.f32 0.0, %v953
    %v955 = vpop.f32.mrb[0].mxu0
    %v956 = vpop.f32.mrb[0].mxu0
    %957 = vdwg.mxu0
    %958 = vmatprep.subr.bf16.mxu0 %v694
    %959 = vmatpush1.bf16.msra.mxu0 %v693
    %960 = vmatprep.subr.bf16.mxu0 %v696
    %961 = vmatpush1.bf16.msra.mxu0 %v695
    %962 = vmatprep.subr.bf16.mxu0 %v698
    %963 = vmatpush1.bf16.msra.mxu0 %v697
    %964 = vmatprep.subr.bf16.mxu0 %v700
    %965 = vmatpush1.bf16.msra.mxu0 %v699
    %966 = vmatprep.subr.bf16.mxu0 %v702
    %967 = vmatpush1.bf16.msra.mxu0 %v701
    %968 = vmatprep.subr.bf16.mxu0 %v704
    %969 = vmatpush1.bf16.msra.mxu0 %v703
    %970 = vmatprep.subr.bf16.mxu0 %v706
    %971 = vmatpush1.bf16.msra.mxu0 %v705
    %972 = vmatprep.subr.bf16.mxu0 %v708
    %973 = vmatpush1.bf16.msra.mxu0 %v707
    %974 = vmatprep.subr.bf16.mxu0 %v710
    %975 = vmatpush1.bf16.msra.mxu0 %v709
    %976 = vmatprep.subr.bf16.mxu0 %v712
    %977 = vmatpush1.bf16.msra.mxu0 %v711
    %978 = vmatprep.subr.bf16.mxu0 %v714
    %979 = vmatpush1.bf16.msra.mxu0 %v713
    %980 = vmatprep.subr.bf16.mxu0 %v716
    %981 = vmatpush1.bf16.msra.mxu0 %v715
    %982 = vmatprep.subr.bf16.mxu0 %v718
    %983 = vmatpush1.bf16.msra.mxu0 %v717
    %984 = vmatprep.subr.bf16.mxu0 %v720
    %985 = vmatpush1.bf16.msra.mxu0 %v719
    %986 = vmatprep.subr.bf16.mxu0 %v722
    %987 = vmatpush1.bf16.msra.mxu0 %v721
    %988 = vmatprep.subr.bf16.mxu0 %v724
    %989 = vmatpush1.bf16.msra.mxu0 %v723
    %990 = vmatprep.mubr.bf16.mxu0 %v264
    %991 = vmatmul.mubr.bf16.gmra.mrb[0].mxu0 %v263
    %v992 = vpop.f32.mrb[0].mxu0
    %v993 = vadd.f32 %v952, %v992
    %v994 = vpop.f32.mrb[0].mxu0
    %v995 = vadd.f32 %v954, %v994
    %v996 = vpop.f32.mrb[0].mxu0
    %v997 = vpop.f32.mrb[0].mxu0
    %998 = vdwg.mxu0
    %999 = vmatprep.subr.bf16.mxu0 %v726
    %1000 = vmatpush1.bf16.msra.mxu0 %v725
    %1001 = vmatprep.subr.bf16.mxu0 %v728
    %1002 = vmatpush1.bf16.msra.mxu0 %v727
    %1003 = vmatprep.subr.bf16.mxu0 %v730
    %1004 = vmatpush1.bf16.msra.mxu0 %v729
    %1005 = vmatprep.subr.bf16.mxu0 %v732
    %1006 = vmatpush1.bf16.msra.mxu0 %v731
    %1007 = vmatprep.subr.bf16.mxu0 %v734
    %1008 = vmatpush1.bf16.msra.mxu0 %v733
    %1009 = vmatprep.subr.bf16.mxu0 %v736
    %1010 = vmatpush1.bf16.msra.mxu0 %v735
    %1011 = vmatprep.subr.bf16.mxu0 %v738
    %1012 = vmatpush1.bf16.msra.mxu0 %v737
    %1013 = vmatprep.subr.bf16.mxu0 %v740
    %1014 = vmatpush1.bf16.msra.mxu0 %v739
    %1015 = vmatprep.subr.bf16.mxu0 %v742
    %1016 = vmatpush1.bf16.msra.mxu0 %v741
    %1017 = vmatprep.subr.bf16.mxu0 %v744
    %1018 = vmatpush1.bf16.msra.mxu0 %v743
    %1019 = vmatprep.subr.bf16.mxu0 %v746
    %1020 = vmatpush1.bf16.msra.mxu0 %v745
    %1021 = vmatprep.subr.bf16.mxu0 %v748
    %1022 = vmatpush1.bf16.msra.mxu0 %v747
    %1023 = vmatprep.subr.bf16.mxu0 %v750
    %1024 = vmatpush1.bf16.msra.mxu0 %v749
    %1025 = vmatprep.subr.bf16.mxu0 %v752
    %1026 = vmatpush1.bf16.msra.mxu0 %v751
    %1027 = vmatprep.subr.bf16.mxu0 %v754
    %1028 = vmatpush1.bf16.msra.mxu0 %v753
    %1029 = vmatprep.subr.bf16.mxu0 %v756
    %1030 = vmatpush1.bf16.msra.mxu0 %v755
    %1031 = vmatprep.mubr.bf16.mxu0 %v266
    %1032 = vmatmul.mubr.bf16.gmra.mrb[0].mxu0 %v265
    %v1033 = vpop.f32.mrb[0].mxu0
    %v1034 = vadd.f32 %v993, %v1033
    %v1035 = vpop.f32.mrb[0].mxu0
    %v1036 = vadd.f32 %v995, %v1035
    %v1037 = vpop.f32.mrb[0].mxu0
    %v1038 = vpop.f32.mrb[0].mxu0
    %1039 = vdwg.mxu0
    %1040 = vmatprep.subr.bf16.mxu0 %v758
    %1041 = vmatpush1.bf16.msra.mxu0 %v757
    %1042 = vmatprep.subr.bf16.mxu0 %v760
    %1043 = vmatpush1.bf16.msra.mxu0 %v759
    %1044 = vmatprep.subr.bf16.mxu0 %v762
    %1045 = vmatpush1.bf16.msra.mxu0 %v761
    %1046 = vmatprep.subr.bf16.mxu0 %v764
    %1047 = vmatpush1.bf16.msra.mxu0 %v763
    %1048 = vmatprep.subr.bf16.mxu0 %v766
    %1049 = vmatpush1.bf16.msra.mxu0 %v765
    %1050 = vmatprep.subr.bf16.mxu0 %v768
    %1051 = vmatpush1.bf16.msra.mxu0 %v767
    %1052 = vmatprep.subr.bf16.mxu0 %v770
    %1053 = vmatpush1.bf16.msra.mxu0 %v769
    %1054 = vmatprep.subr.bf16.mxu0 %v772
    %1055 = vmatpush1.bf16.msra.mxu0 %v771
    %1056 = vmatprep.subr.bf16.mxu0 %v774
    %1057 = vmatpush1.bf16.msra.mxu0 %v773
    %1058 = vmatprep.subr.bf16.mxu0 %v776
    %1059 = vmatpush1.bf16.msra.mxu0 %v775
    %1060 = vmatprep.subr.bf16.mxu0 %v778
    %1061 = vmatpush1.bf16.msra.mxu0 %v777
    %1062 = vmatprep.subr.bf16.mxu0 %v780
    %1063 = vmatpush1.bf16.msra.mxu0 %v779
    %1064 = vmatprep.subr.bf16.mxu0 %v782
    %1065 = vmatpush1.bf16.msra.mxu0 %v781
    %1066 = vmatprep.subr.bf16.mxu0 %v784
    %1067 = vmatpush1.bf16.msra.mxu0 %v783
    %1068 = vmatprep.subr.bf16.mxu0 %v786
    %1069 = vmatpush1.bf16.msra.mxu0 %v785
    %1070 = vmatprep.subr.bf16.mxu0 %v788
    %1071 = vmatpush1.bf16.msra.mxu0 %v787
    %1072 = vmatprep.mubr.bf16.mxu0 %v268
    %1073 = vmatmul.mubr.bf16.gmra.mrb[0].mxu0 %v267
    %v1074 = vpop.f32.mrb[0].mxu0
    %v1075 = vadd.f32 %v1034, %v1074
    %v1076 = vpop.f32.mrb[0].mxu0
    %v1077 = vadd.f32 %v1036, %v1076
    %v1078 = vpop.f32.mrb[0].mxu0
    %v1079 = vpop.f32.mrb[0].mxu0
    %1080 = vdwg.mxu0
    %v1081 = vld [vmem:[%s2] sm:$0xff]
    %1083 = vset.pattern.permute.xlu0 0
    %1084 = vperm.xlu0 %1083, %v1081
    %v1085 = vpop.permute.xlu0 %1084
    %v1087 = vmul.f32 %v1075, %v1085
    %v1088 = vmul.f32 %v1077, %v1085
    %v1089 = vld [vmem:[%s4] sm:$0x3]
    %v1091 = vlaneseq
    %v1092 = vshrl.u32 %v1091, 7
    %v1093 = vsub.s32 0, %v1092
    %v1094 = vrot.slane %v1089, %v1093
    %v1095 = vlaneseq
    %v1096 = vshrl.u32 %v1095, 7
    %v1097 = vsub.s32 1, %v1096
    %v1098 = vrot.slane %v1089, %v1097
    %v1101 = vmul.f32 %v1087, %v1094
    %v1102 = vmul.f32 %v1088, %v1098
    %v1103 = vxor.u32 %v1101, 2147483648
    %v1104 = vxor.u32 %v1102, 2147483648
    %v1105 = vmul.f32 %v1103, 1.442695
    %v1106 = vpow.pop %v1105
    %v1107 = vmul.f32 %v1104, 1.442695
    %v1108 = vpow.pop %v1107
    %v1109 = vadd.f32 %v1106, 1.0
    %v1110 = vadd.f32 %v1108, 1.0
    %v1111 = vrcp.pop %v1109
    %v1112 = vmul.f32 1.0, %v1111
    %v1113 = vrcp.pop %v1110
    %v1114 = vmul.f32 1.0, %v1113
    %v1115 = vld [vmem:[#allocation8] sm:$0xff]
    %v1116 = vld [vmem:[#allocation8 + $0x8] sm:$0xff]
    %v1117 = vld [vmem:[#allocation8 + $0x10] sm:$0xff]
    %v1118 = vld [vmem:[#allocation8 + $0x18] sm:$0xff]
    %v1119 = vld [vmem:[#allocation8 + $0x20] sm:$0xff]
    %v1120 = vld [vmem:[#allocation8 + $0x28] sm:$0xff]
    %v1121 = vld [vmem:[#allocation8 + $0x30] sm:$0xff]
    %v1122 = vld [vmem:[#allocation8 + $0x38] sm:$0xff]
    %v1123 = vld [vmem:[#allocation8 + $0x40] sm:$0xff]
    %v1124 = vld [vmem:[#allocation8 + $0x48] sm:$0xff]
    %v1125 = vld [vmem:[#allocation8 + $0x50] sm:$0xff]
    %v1126 = vld [vmem:[#allocation8 + $0x58] sm:$0xff]
    %v1127 = vld [vmem:[#allocation8 + $0x60] sm:$0xff]
    %v1128 = vld [vmem:[#allocation8 + $0x68] sm:$0xff]
    %v1129 = vld [vmem:[#allocation8 + $0x70] sm:$0xff]
    %v1130 = vld [vmem:[#allocation8 + $0x78] sm:$0xff]
    %v1131 = vld [vmem:[#allocation8 + $0x80] sm:$0xff]
    %v1132 = vld [vmem:[#allocation8 + $0x88] sm:$0xff]
    %v1133 = vld [vmem:[#allocation8 + $0x90] sm:$0xff]
    %v1134 = vld [vmem:[#allocation8 + $0x98] sm:$0xff]
    %v1135 = vld [vmem:[#allocation8 + $0xa0] sm:$0xff]
    %v1136 = vld [vmem:[#allocation8 + $0xa8] sm:$0xff]
    %v1137 = vld [vmem:[#allocation8 + $0xb0] sm:$0xff]
    %v1138 = vld [vmem:[#allocation8 + $0xb8] sm:$0xff]
    %v1139 = vld [vmem:[#allocation8 + $0xc0] sm:$0xff]
    %v1140 = vld [vmem:[#allocation8 + $0xc8] sm:$0xff]
    %v1141 = vld [vmem:[#allocation8 + $0xd0] sm:$0xff]
    %v1142 = vld [vmem:[#allocation8 + $0xd8] sm:$0xff]
    %v1143 = vld [vmem:[#allocation8 + $0xe0] sm:$0xff]
    %v1144 = vld [vmem:[#allocation8 + $0xe8] sm:$0xff]
    %v1145 = vld [vmem:[#allocation8 + $0xf0] sm:$0xff]
    %v1146 = vld [vmem:[#allocation8 + $0xf8] sm:$0xff]
    %v1147 = vld [vmem:[#allocation2] sm:$0xff]
    %v1148 = vld [vmem:[#allocation2 + $0x8] sm:$0xff]
    %v1181 = vunpack.c.l.b16 %v1115
    %v1182 = vunpack.c.h.b16 %v1115
    %v1183 = vunpack.c.l.b16 %v1116
    %v1184 = vunpack.c.h.b16 %v1116
    %v1185 = vunpack.c.l.b16 %v1117
    %v1186 = vunpack.c.h.b16 %v1117
    %v1187 = vunpack.c.l.b16 %v1118
    %v1188 = vunpack.c.h.b16 %v1118
    %v1189 = vunpack.c.l.b16 %v1119
    %v1190 = vunpack.c.h.b16 %v1119
    %v1191 = vunpack.c.l.b16 %v1120
    %v1192 = vunpack.c.h.b16 %v1120
    %v1193 = vunpack.c.l.b16 %v1121
    %v1194 = vunpack.c.h.b16 %v1121
    %v1195 = vunpack.c.l.b16 %v1122
    %v1196 = vunpack.c.h.b16 %v1122
    %v1197 = vunpack.c.l.b16 %v1123
    %v1198 = vunpack.c.h.b16 %v1123
    %v1199 = vunpack.c.l.b16 %v1124
    %v1200 = vunpack.c.h.b16 %v1124
    %v1201 = vunpack.c.l.b16 %v1125
    %v1202 = vunpack.c.h.b16 %v1125
    %v1203 = vunpack.c.l.b16 %v1126
    %v1204 = vunpack.c.h.b16 %v1126
    %v1205 = vunpack.c.l.b16 %v1127
    %v1206 = vunpack.c.h.b16 %v1127
    %v1207 = vunpack.c.l.b16 %v1128
    %v1208 = vunpack.c.h.b16 %v1128
    %v1209 = vunpack.c.l.b16 %v1129
    %v1210 = vunpack.c.h.b16 %v1129
    %v1211 = vunpack.c.l.b16 %v1130
    %v1212 = vunpack.c.h.b16 %v1130
    %v1213 = vunpack.c.l.b16 %v1131
    %v1214 = vunpack.c.h.b16 %v1131
    %v1215 = vunpack.c.l.b16 %v1132
    %v1216 = vunpack.c.h.b16 %v1132
    %v1217 = vunpack.c.l.b16 %v1133
    %v1218 = vunpack.c.h.b16 %v1133
    %v1219 = vunpack.c.l.b16 %v1134
    %v1220 = vunpack.c.h.b16 %v1134
    %v1221 = vunpack.c.l.b16 %v1135
    %v1222 = vunpack.c.h.b16 %v1135
    %v1223 = vunpack.c.l.b16 %v1136
    %v1224 = vunpack.c.h.b16 %v1136
    %v1225 = vunpack.c.l.b16 %v1137
    %v1226 = vunpack.c.h.b16 %v1137
    %v1227 = vunpack.c.l.b16 %v1138
    %v1228 = vunpack.c.h.b16 %v1138
    %v1229 = vunpack.c.l.b16 %v1139
    %v1230 = vunpack.c.h.b16 %v1139
    %v1231 = vunpack.c.l.b16 %v1140
    %v1232 = vunpack.c.h.b16 %v1140
    %v1233 = vunpack.c.l.b16 %v1141
    %v1234 = vunpack.c.h.b16 %v1141
    %v1235 = vunpack.c.l.b16 %v1142
    %v1236 = vunpack.c.h.b16 %v1142
    %v1237 = vunpack.c.l.b16 %v1143
    %v1238 = vunpack.c.h.b16 %v1143
    %v1239 = vunpack.c.l.b16 %v1144
    %v1240 = vunpack.c.h.b16 %v1144
    %v1241 = vunpack.c.l.b16 %v1145
    %v1242 = vunpack.c.h.b16 %v1145
    %v1243 = vunpack.c.l.b16 %v1146
    %v1244 = vunpack.c.h.b16 %v1146
    %v1245 = vpack.c.b16 %v1183, %v1181
    %v1246 = vpack.c.b16 %v1184, %v1182
    %v1247 = vpack.c.b16 %v1187, %v1185
    %v1248 = vpack.c.b16 %v1188, %v1186
    %v1249 = vpack.c.b16 %v1191, %v1189
    %v1250 = vpack.c.b16 %v1192, %v1190
    %v1251 = vpack.c.b16 %v1195, %v1193
    %v1252 = vpack.c.b16 %v1196, %v1194
    %v1253 = vpack.c.b16 %v1199, %v1197
    %v1254 = vpack.c.b16 %v1200, %v1198
    %v1255 = vpack.c.b16 %v1203, %v1201
    %v1256 = vpack.c.b16 %v1204, %v1202
    %v1257 = vpack.c.b16 %v1207, %v1205
    %v1258 = vpack.c.b16 %v1208, %v1206
    %v1259 = vpack.c.b16 %v1211, %v1209
    %v1260 = vpack.c.b16 %v1212, %v1210
    %v1261 = vpack.c.b16 %v1215, %v1213
    %v1262 = vpack.c.b16 %v1216, %v1214
    %v1263 = vpack.c.b16 %v1219, %v1217
    %v1264 = vpack.c.b16 %v1220, %v1218
    %v1265 = vpack.c.b16 %v1223, %v1221
    %v1266 = vpack.c.b16 %v1224, %v1222
    %v1267 = vpack.c.b16 %v1227, %v1225
    %v1268 = vpack.c.b16 %v1228, %v1226
    %v1269 = vpack.c.b16 %v1231, %v1229
    %v1270 = vpack.c.b16 %v1232, %v1230
    %v1271 = vpack.c.b16 %v1235, %v1233
    %v1272 = vpack.c.b16 %v1236, %v1234
    %v1273 = vpack.c.b16 %v1239, %v1237
    %v1274 = vpack.c.b16 %v1240, %v1238
    %v1275 = vpack.c.b16 %v1243, %v1241
    %v1276 = vpack.c.b16 %v1244, %v1242
    %1309 = vmatprep.subr.bf16.mxu0 %v1246
    %1310 = vmatpush1.bf16.msra.mxu0 %v1245
    %1311 = vmatprep.subr.bf16.mxu0 %v1248
    %1312 = vmatpush1.bf16.msra.mxu0 %v1247
    %1313 = vmatprep.subr.bf16.mxu0 %v1250
    %1314 = vmatpush1.bf16.msra.mxu0 %v1249
    %1315 = vmatprep.subr.bf16.mxu0 %v1252
    %1316 = vmatpush1.bf16.msra.mxu0 %v1251
    %1317 = vmatprep.subr.bf16.mxu0 %v1254
    %1318 = vmatpush1.bf16.msra.mxu0 %v1253
    %1319 = vmatprep.subr.bf16.mxu0 %v1256
    %1320 = vmatpush1.bf16.msra.mxu0 %v1255
    %1321 = vmatprep.subr.bf16.mxu0 %v1258
    %1322 = vmatpush1.bf16.msra.mxu0 %v1257
    %1323 = vmatprep.subr.bf16.mxu0 %v1260
    %1324 = vmatpush1.bf16.msra.mxu0 %v1259
    %1325 = vmatprep.subr.bf16.mxu0 %v1262
    %1326 = vmatpush1.bf16.msra.mxu0 %v1261
    %1327 = vmatprep.subr.bf16.mxu0 %v1264
    %1328 = vmatpush1.bf16.msra.mxu0 %v1263
    %1329 = vmatprep.subr.bf16.mxu0 %v1266
    %1330 = vmatpush1.bf16.msra.mxu0 %v1265
    %1331 = vmatprep.subr.bf16.mxu0 %v1268
    %1332 = vmatpush1.bf16.msra.mxu0 %v1267
    %1333 = vmatprep.subr.bf16.mxu0 %v1270
    %1334 = vmatpush1.bf16.msra.mxu0 %v1269
    %1335 = vmatprep.subr.bf16.mxu0 %v1272
    %1336 = vmatpush1.bf16.msra.mxu0 %v1271
    %1337 = vmatprep.subr.bf16.mxu0 %v1274
    %1338 = vmatpush1.bf16.msra.mxu0 %v1273
    %1339 = vmatprep.subr.bf16.mxu0 %v1276
    %1340 = vmatpush1.bf16.msra.mxu0 %v1275
    %1341 = vmatprep.mubr.bf16.mxu0 0
    %1342 = vmatmul.mubr.bf16.gmra.mrb[0].mxu0 0
    %v1343 = vpop.f32.mrb[0].mxu0
    %v1344 = vadd.f32 0.0, %v1343
    %v1345 = vpop.f32.mrb[0].mxu0
    %v1346 = vadd.f32 0.0, %v1345
    %v1347 = vpop.f32.mrb[0].mxu0
    %v1348 = vpop.f32.mrb[0].mxu0
    %1349 = vdwg.mxu0
    %v1350 = vadd.f32 %v1147, %v1344
    %v1351 = vadd.f32 %v1148, %v1346
    %v1352 = vtanh.pop %v1350
    %v1353 = vtanh.pop %v1351
    %s1354 = scalar_lea.vmem [#allocation2], 16
    %v1355 = vld [vmem:[%s1354] sm:$0xff]
    %v1356 = vld [vmem:[%s1354 + $0x8] sm:$0xff]
    %v1357 = vpack.c.bf16 %v1352, %v1352
    %v1358 = vpack.c.bf16 %v1353, %v1353
    %1359 = vmatprep.subr.bf16.mxu0 %v1246
    %1360 = vmatpush1.bf16.msra.mxu0 %v1245
    %1361 = vmatprep.subr.bf16.mxu0 %v1248
    %1362 = vmatpush1.bf16.msra.mxu0 %v1247
    %1363 = vmatprep.subr.bf16.mxu0 %v1250
    %1364 = vmatpush1.bf16.msra.mxu0 %v1249
    %1365 = vmatprep.subr.bf16.mxu0 %v1252
    %1366 = vmatpush1.bf16.msra.mxu0 %v1251
    %1367 = vmatprep.subr.bf16.mxu0 %v1254
    %1368 = vmatpush1.bf16.msra.mxu0 %v1253
    %1369 = vmatprep.subr.bf16.mxu0 %v1256
    %1370 = vmatpush1.bf16.msra.mxu0 %v1255
    %1371 = vmatprep.subr.bf16.mxu0 %v1258
    %1372 = vmatpush1.bf16.msra.mxu0 %v1257
    %1373 = vmatprep.subr.bf16.mxu0 %v1260
    %1374 = vmatpush1.bf16.msra.mxu0 %v1259
    %1375 = vmatprep.subr.bf16.mxu0 %v1262
    %1376 = vmatpush1.bf16.msra.mxu0 %v1261
    %1377 = vmatprep.subr.bf16.mxu0 %v1264
    %1378 = vmatpush1.bf16.msra.mxu0 %v1263
    %1379 = vmatprep.subr.bf16.mxu0 %v1266
    %1380 = vmatpush1.bf16.msra.mxu0 %v1265
    %1381 = vmatprep.subr.bf16.mxu0 %v1268
    %1382 = vmatpush1.bf16.msra.mxu0 %v1267
    %1383 = vmatprep.subr.bf16.mxu0 %v1270
    %1384 = vmatpush1.bf16.msra.mxu0 %v1269
    %1385 = vmatprep.subr.bf16.mxu0 %v1272
    %1386 = vmatpush1.bf16.msra.mxu0 %v1271
    %1387 = vmatprep.subr.bf16.mxu0 %v1274
    %1388 = vmatpush1.bf16.msra.mxu0 %v1273
    %1389 = vmatprep.subr.bf16.mxu0 %v1276
    %1390 = vmatpush1.bf16.msra.mxu0 %v1275
    %1391 = vmatprep.mubr.bf16.mxu0 %v1358
    %1392 = vmatmul.mubr.bf16.gmra.mrb[0].mxu0 %v1357
    %v1393 = vpop.f32.mrb[0].mxu0
    %v1394 = vadd.f32 0.0, %v1393
    %v1395 = vpop.f32.mrb[0].mxu0
    %v1396 = vadd.f32 0.0, %v1395
    %v1397 = vpop.f32.mrb[0].mxu0
    %v1398 = vpop.f32.mrb[0].mxu0
    %1399 = vdwg.mxu0
    %v1400 = vadd.f32 %v1355, %v1394
    %v1401 = vadd.f32 %v1356, %v1396
    %v1402 = vtanh.pop %v1400
    %v1403 = vtanh.pop %v1401
    %s1404 = scalar_lea.vmem [#allocation2], 32
    %v1405 = vld [vmem:[%s1404] sm:$0xff]
    %v1406 = vld [vmem:[%s1404 + $0x8] sm:$0xff]
    %v1407 = vpack.c.bf16 %v1402, %v1402
    %v1408 = vpack.c.bf16 %v1403, %v1403
    %1409 = vmatprep.subr.bf16.mxu0 %v1246
    %1410 = vmatpush1.bf16.msra.mxu0 %v1245
    %1411 = vmatprep.subr.bf16.mxu0 %v1248
    %1412 = vmatpush1.bf16.msra.mxu0 %v1247
    %1413 = vmatprep.subr.bf16.mxu0 %v1250
    %1414 = vmatpush1.bf16.msra.mxu0 %v1249
    %1415 = vmatprep.subr.bf16.mxu0 %v1252
    %1416 = vmatpush1.bf16.msra.mxu0 %v1251
    %1417 = vmatprep.subr.bf16.mxu0 %v1254
    %1418 = vmatpush1.bf16.msra.mxu0 %v1253
    %1419 = vmatprep.subr.bf16.mxu0 %v1256
    %1420 = vmatpush1.bf16.msra.mxu0 %v1255
    %1421 = vmatprep.subr.bf16.mxu0 %v1258
    %1422 = vmatpush1.bf16.msra.mxu0 %v1257
    %1423 = vmatprep.subr.bf16.mxu0 %v1260
    %1424 = vmatpush1.bf16.msra.mxu0 %v1259
    %1425 = vmatprep.subr.bf16.mxu0 %v1262
    %1426 = vmatpush1.bf16.msra.mxu0 %v1261
    %1427 = vmatprep.subr.bf16.mxu0 %v1264
    %1428 = vmatpush1.bf16.msra.mxu0 %v1263
    %1429 = vmatprep.subr.bf16.mxu0 %v1266
    %1430 = vmatpush1.bf16.msra.mxu0 %v1265
    %1431 = vmatprep.subr.bf16.mxu0 %v1268
    %1432 = vmatpush1.bf16.msra.mxu0 %v1267
    %1433 = vmatprep.subr.bf16.mxu0 %v1270
    %1434 = vmatpush1.bf16.msra.mxu0 %v1269
    %1435 = vmatprep.subr.bf16.mxu0 %v1272
    %1436 = vmatpush1.bf16.msra.mxu0 %v1271
    %1437 = vmatprep.subr.bf16.mxu0 %v1274
    %1438 = vmatpush1.bf16.msra.mxu0 %v1273
    %1439 = vmatprep.subr.bf16.mxu0 %v1276
    %1440 = vmatpush1.bf16.msra.mxu0 %v1275
    %1441 = vmatprep.mubr.bf16.mxu0 %v1408
    %1442 = vmatmul.mubr.bf16.gmra.mrb[0].mxu0 %v1407
    %v1443 = vpop.f32.mrb[0].mxu0
    %v1444 = vadd.f32 0.0, %v1443
    %v1445 = vpop.f32.mrb[0].mxu0
    %v1446 = vadd.f32 0.0, %v1445
    %v1447 = vpop.f32.mrb[0].mxu0
    %v1448 = vpop.f32.mrb[0].mxu0
    %1449 = vdwg.mxu0
    %v1450 = vadd.f32 %v1405, %v1444
    %v1451 = vadd.f32 %v1406, %v1446
    %v1452 = vtanh.pop %v1450
    %v1453 = vtanh.pop %v1451
    %s1454 = scalar_lea.vmem [#allocation2], 48
    %v1455 = vld [vmem:[%s1454] sm:$0xff]
    %v1456 = vld [vmem:[%s1454 + $0x8] sm:$0xff]
    %v1457 = vpack.c.bf16 %v1452, %v1452
    %v1458 = vpack.c.bf16 %v1453, %v1453
    %1459 = vmatprep.subr.bf16.mxu0 %v1246
    %1460 = vmatpush1.bf16.msra.mxu0 %v1245
    %1461 = vmatprep.subr.bf16.mxu0 %v1248
    %1462 = vmatpush1.bf16.msra.mxu0 %v1247
    %1463 = vmatprep.subr.bf16.mxu0 %v1250
    %1464 = vmatpush1.bf16.msra.mxu0 %v1249
    %1465 = vmatprep.subr.bf16.mxu0 %v1252
    %1466 = vmatpush1.bf16.msra.mxu0 %v1251
    %1467 = vmatprep.subr.bf16.mxu0 %v1254
    %1468 = vmatpush1.bf16.msra.mxu0 %v1253
    %1469 = vmatprep.subr.bf16.mxu0 %v1256
    %1470 = vmatpush1.bf16.msra.mxu0 %v1255
    %1471 = vmatprep.subr.bf16.mxu0 %v1258
    %1472 = vmatpush1.bf16.msra.mxu0 %v1257
    %1473 = vmatprep.subr.bf16.mxu0 %v1260
    %1474 = vmatpush1.bf16.msra.mxu0 %v1259
    %1475 = vmatprep.subr.bf16.mxu0 %v1262
    %1476 = vmatpush1.bf16.msra.mxu0 %v1261
    %1477 = vmatprep.subr.bf16.mxu0 %v1264
    %1478 = vmatpush1.bf16.msra.mxu0 %v1263
    %1479 = vmatprep.subr.bf16.mxu0 %v1266
    %1480 = vmatpush1.bf16.msra.mxu0 %v1265
    %1481 = vmatprep.subr.bf16.mxu0 %v1268
    %1482 = vmatpush1.bf16.msra.mxu0 %v1267
    %1483 = vmatprep.subr.bf16.mxu0 %v1270
    %1484 = vmatpush1.bf16.msra.mxu0 %v1269
    %1485 = vmatprep.subr.bf16.mxu0 %v1272
    %1486 = vmatpush1.bf16.msra.mxu0 %v1271
    %1487 = vmatprep.subr.bf16.mxu0 %v1274
    %1488 = vmatpush1.bf16.msra.mxu0 %v1273
    %1489 = vmatprep.subr.bf16.mxu0 %v1276
    %1490 = vmatpush1.bf16.msra.mxu0 %v1275
    %1491 = vmatprep.mubr.bf16.mxu0 %v1458
    %1492 = vmatmul.mubr.bf16.gmra.mrb[0].mxu0 %v1457
    %v1493 = vpop.f32.mrb[0].mxu0
    %v1494 = vadd.f32 0.0, %v1493
    %v1495 = vpop.f32.mrb[0].mxu0
    %v1496 = vadd.f32 0.0, %v1495
    %v1497 = vpop.f32.mrb[0].mxu0
    %v1498 = vpop.f32.mrb[0].mxu0
    %1499 = vdwg.mxu0
    %v1500 = vadd.f32 %v1455, %v1494
    %v1501 = vadd.f32 %v1456, %v1496
    %v1502 = vtanh.pop %v1500
    %v1503 = vtanh.pop %v1501
    %s1504 = scalar_lea.vmem [#allocation2], 64
    %v1505 = vld [vmem:[%s1504] sm:$0xff]
    %v1506 = vld [vmem:[%s1504 + $0x8] sm:$0xff]
    %v1507 = vpack.c.bf16 %v1502, %v1502
    %v1508 = vpack.c.bf16 %v1503, %v1503
    %1509 = vmatprep.subr.bf16.mxu0 %v1246
    %1510 = vmatpush1.bf16.msra.mxu0 %v1245
    %1511 = vmatprep.subr.bf16.mxu0 %v1248
    %1512 = vmatpush1.bf16.msra.mxu0 %v1247
    %1513 = vmatprep.subr.bf16.mxu0 %v1250
    %1514 = vmatpush1.bf16.msra.mxu0 %v1249
    %1515 = vmatprep.subr.bf16.mxu0 %v1252
    %1516 = vmatpush1.bf16.msra.mxu0 %v1251
    %1517 = vmatprep.subr.bf16.mxu0 %v1254
    %1518 = vmatpush1.bf16.msra.mxu0 %v1253
    %1519 = vmatprep.subr.bf16.mxu0 %v1256
    %1520 = vmatpush1.bf16.msra.mxu0 %v1255
    %1521 = vmatprep.subr.bf16.mxu0 %v1258
    %1522 = vmatpush1.bf16.msra.mxu0 %v1257
    %1523 = vmatprep.subr.bf16.mxu0 %v1260
    %1524 = vmatpush1.bf16.msra.mxu0 %v1259
    %1525 = vmatprep.subr.bf16.mxu0 %v1262
    %1526 = vmatpush1.bf16.msra.mxu0 %v1261
    %1527 = vmatprep.subr.bf16.mxu0 %v1264
    %1528 = vmatpush1.bf16.msra.mxu0 %v1263
    %1529 = vmatprep.subr.bf16.mxu0 %v1266
    %1530 = vmatpush1.bf16.msra.mxu0 %v1265
    %1531 = vmatprep.subr.bf16.mxu0 %v1268
    %1532 = vmatpush1.bf16.msra.mxu0 %v1267
    %1533 = vmatprep.subr.bf16.mxu0 %v1270
    %1534 = vmatpush1.bf16.msra.mxu0 %v1269
    %1535 = vmatprep.subr.bf16.mxu0 %v1272
    %1536 = vmatpush1.bf16.msra.mxu0 %v1271
    %1537 = vmatprep.subr.bf16.mxu0 %v1274
    %1538 = vmatpush1.bf16.msra.mxu0 %v1273
    %1539 = vmatprep.subr.bf16.mxu0 %v1276
    %1540 = vmatpush1.bf16.msra.mxu0 %v1275
    %1541 = vmatprep.mubr.bf16.mxu0 %v1508
    %1542 = vmatmul.mubr.bf16.gmra.mrb[0].mxu0 %v1507
    %v1543 = vpop.f32.mrb[0].mxu0
    %v1544 = vadd.f32 0.0, %v1543
    %v1545 = vpop.f32.mrb[0].mxu0
    %v1546 = vadd.f32 0.0, %v1545
    %v1547 = vpop.f32.mrb[0].mxu0
    %v1548 = vpop.f32.mrb[0].mxu0
    %1549 = vdwg.mxu0
    %v1550 = vadd.f32 %v1505, %v1544
    %v1551 = vadd.f32 %v1506, %v1546
    %v1552 = vtanh.pop %v1550
    %v1553 = vtanh.pop %v1551
    %s1554 = scalar_lea.vmem [#allocation2], 80
    %v1555 = vld [vmem:[%s1554] sm:$0xff]
    %v1556 = vld [vmem:[%s1554 + $0x8] sm:$0xff]
    %v1557 = vpack.c.bf16 %v1552, %v1552
    %v1558 = vpack.c.bf16 %v1553, %v1553
    %1559 = vmatprep.subr.bf16.mxu0 %v1246
    %1560 = vmatpush1.bf16.msra.mxu0 %v1245
    %1561 = vmatprep.subr.bf16.mxu0 %v1248
    %1562 = vmatpush1.bf16.msra.mxu0 %v1247
    %1563 = vmatprep.subr.bf16.mxu0 %v1250
    %1564 = vmatpush1.bf16.msra.mxu0 %v1249
    %1565 = vmatprep.subr.bf16.mxu0 %v1252
    %1566 = vmatpush1.bf16.msra.mxu0 %v1251
    %1567 = vmatprep.subr.bf16.mxu0 %v1254
    %1568 = vmatpush1.bf16.msra.mxu0 %v1253
    %1569 = vmatprep.subr.bf16.mxu0 %v1256
    %1570 = vmatpush1.bf16.msra.mxu0 %v1255
    %1571 = vmatprep.subr.bf16.mxu0 %v1258
    %1572 = vmatpush1.bf16.msra.mxu0 %v1257
    %1573 = vmatprep.subr.bf16.mxu0 %v1260
    %1574 = vmatpush1.bf16.msra.mxu0 %v1259
    %1575 = vmatprep.subr.bf16.mxu0 %v1262
    %1576 = vmatpush1.bf16.msra.mxu0 %v1261
    %1577 = vmatprep.subr.bf16.mxu0 %v1264
    %1578 = vmatpush1.bf16.msra.mxu0 %v1263
    %1579 = vmatprep.subr.bf16.mxu0 %v1266
    %1580 = vmatpush1.bf16.msra.mxu0 %v1265
    %1581 = vmatprep.subr.bf16.mxu0 %v1268
    %1582 = vmatpush1.bf16.msra.mxu0 %v1267
    %1583 = vmatprep.subr.bf16.mxu0 %v1270
    %1584 = vmatpush1.bf16.msra.mxu0 %v1269
    %1585 = vmatprep.subr.bf16.mxu0 %v1272
    %1586 = vmatpush1.bf16.msra.mxu0 %v1271
    %1587 = vmatprep.subr.bf16.mxu0 %v1274
    %1588 = vmatpush1.bf16.msra.mxu0 %v1273
    %1589 = vmatprep.subr.bf16.mxu0 %v1276
    %1590 = vmatpush1.bf16.msra.mxu0 %v1275
    %1591 = vmatprep.mubr.bf16.mxu0 %v1558
    %1592 = vmatmul.mubr.bf16.gmra.mrb[0].mxu0 %v1557
    %v1593 = vpop.f32.mrb[0].mxu0
    %v1594 = vadd.f32 0.0, %v1593
    %v1595 = vpop.f32.mrb[0].mxu0
    %v1596 = vadd.f32 0.0, %v1595
    %v1597 = vpop.f32.mrb[0].mxu0
    %v1598 = vpop.f32.mrb[0].mxu0
    %1599 = vdwg.mxu0
    %v1600 = vadd.f32 %v1555, %v1594
    %v1601 = vadd.f32 %v1556, %v1596
    %v1602 = vtanh.pop %v1600
    %v1603 = vtanh.pop %v1601
    %v1604 = vpack.c.bf16 %v1602, %v1602
    %v1605 = vpack.c.bf16 %v1603, %v1603
    %v1606 = vld [vmem:[#allocation10] sm:$0xff]
    %v1607 = vld [vmem:[#allocation10 + $0x8] sm:$0xff]
    %v1608 = vld [vmem:[#allocation10 + $0x10] sm:$0xff]
    %v1609 = vld [vmem:[#allocation10 + $0x18] sm:$0xff]
    %v1610 = vld [vmem:[#allocation10 + $0x20] sm:$0xff]
    %v1611 = vld [vmem:[#allocation10 + $0x28] sm:$0xff]
    %v1612 = vld [vmem:[#allocation10 + $0x30] sm:$0xff]
    %v1613 = vld [vmem:[#allocation10 + $0x38] sm:$0xff]
    %v1614 = vld [vmem:[#allocation10 + $0x40] sm:$0xff]
    %v1615 = vld [vmem:[#allocation10 + $0x48] sm:$0xff]
    %v1616 = vld [vmem:[#allocation10 + $0x50] sm:$0xff]
    %v1617 = vld [vmem:[#allocation10 + $0x58] sm:$0xff]
    %v1618 = vld [vmem:[#allocation10 + $0x60] sm:$0xff]
    %v1619 = vld [vmem:[#allocation10 + $0x68] sm:$0xff]
    %v1620 = vld [vmem:[#allocation10 + $0x70] sm:$0xff]
    %v1621 = vld [vmem:[#allocation10 + $0x78] sm:$0xff]
    %v1622 = vld [vmem:[#allocation10 + $0x80] sm:$0xff]
    %v1623 = vld [vmem:[#allocation10 + $0x88] sm:$0xff]
    %v1624 = vld [vmem:[#allocation10 + $0x90] sm:$0xff]
    %v1625 = vld [vmem:[#allocation10 + $0x98] sm:$0xff]
    %v1626 = vld [vmem:[#allocation10 + $0xa0] sm:$0xff]
    %v1627 = vld [vmem:[#allocation10 + $0xa8] sm:$0xff]
    %v1628 = vld [vmem:[#allocation10 + $0xb0] sm:$0xff]
    %v1629 = vld [vmem:[#allocation10 + $0xb8] sm:$0xff]
    %v1630 = vld [vmem:[#allocation10 + $0xc0] sm:$0xff]
    %v1631 = vld [vmem:[#allocation10 + $0xc8] sm:$0xff]
    %v1632 = vld [vmem:[#allocation10 + $0xd0] sm:$0xff]
    %v1633 = vld [vmem:[#allocation10 + $0xd8] sm:$0xff]
    %v1634 = vld [vmem:[#allocation10 + $0xe0] sm:$0xff]
    %v1635 = vld [vmem:[#allocation10 + $0xe8] sm:$0xff]
    %v1636 = vld [vmem:[#allocation10 + $0xf0] sm:$0xff]
    %v1637 = vld [vmem:[#allocation10 + $0xf8] sm:$0xff]
    %v1638 = vld [vmem:[%s7] sm:$0x3]
    %v1640 = vlaneseq
    %v1641 = vshrl.u32 %v1640, 7
    %v1642 = vsub.s32 0, %v1641
    %v1643 = vrot.slane %v1638, %v1642
    %v1644 = vlaneseq
    %v1645 = vshrl.u32 %v1644, 7
    %v1646 = vsub.s32 1, %v1645
    %v1647 = vrot.slane %v1638, %v1646
    %v1682 = vunpack.c.l.b16 %v1606
    %v1683 = vunpack.c.h.b16 %v1606
    %v1684 = vunpack.c.l.b16 %v1607
    %v1685 = vunpack.c.h.b16 %v1607
    %v1686 = vunpack.c.l.b16 %v1608
    %v1687 = vunpack.c.h.b16 %v1608
    %v1688 = vunpack.c.l.b16 %v1609
    %v1689 = vunpack.c.h.b16 %v1609
    %v1690 = vunpack.c.l.b16 %v1610
    %v1691 = vunpack.c.h.b16 %v1610
    %v1692 = vunpack.c.l.b16 %v1611
    %v1693 = vunpack.c.h.b16 %v1611
    %v1694 = vunpack.c.l.b16 %v1612
    %v1695 = vunpack.c.h.b16 %v1612
    %v1696 = vunpack.c.l.b16 %v1613
    %v1697 = vunpack.c.h.b16 %v1613
    %v1698 = vunpack.c.l.b16 %v1614
    %v1699 = vunpack.c.h.b16 %v1614
    %v1700 = vunpack.c.l.b16 %v1615
    %v1701 = vunpack.c.h.b16 %v1615
    %v1702 = vunpack.c.l.b16 %v1616
    %v1703 = vunpack.c.h.b16 %v1616
    %v1704 = vunpack.c.l.b16 %v1617
    %v1705 = vunpack.c.h.b16 %v1617
    %v1706 = vunpack.c.l.b16 %v1618
    %v1707 = vunpack.c.h.b16 %v1618
    %v1708 = vunpack.c.l.b16 %v1619
    %v1709 = vunpack.c.h.b16 %v1619
    %v1710 = vunpack.c.l.b16 %v1620
    %v1711 = vunpack.c.h.b16 %v1620
    %v1712 = vunpack.c.l.b16 %v1621
    %v1713 = vunpack.c.h.b16 %v1621
    %v1714 = vunpack.c.l.b16 %v1622
    %v1715 = vunpack.c.h.b16 %v1622
    %v1716 = vunpack.c.l.b16 %v1623
    %v1717 = vunpack.c.h.b16 %v1623
    %v1718 = vunpack.c.l.b16 %v1624
    %v1719 = vunpack.c.h.b16 %v1624
    %v1720 = vunpack.c.l.b16 %v1625
    %v1721 = vunpack.c.h.b16 %v1625
    %v1722 = vunpack.c.l.b16 %v1626
    %v1723 = vunpack.c.h.b16 %v1626
    %v1724 = vunpack.c.l.b16 %v1627
    %v1725 = vunpack.c.h.b16 %v1627
    %v1726 = vunpack.c.l.b16 %v1628
    %v1727 = vunpack.c.h.b16 %v1628
    %v1728 = vunpack.c.l.b16 %v1629
    %v1729 = vunpack.c.h.b16 %v1629
    %v1730 = vunpack.c.l.b16 %v1630
    %v1731 = vunpack.c.h.b16 %v1630
    %v1732 = vunpack.c.l.b16 %v1631
    %v1733 = vunpack.c.h.b16 %v1631
    %v1734 = vunpack.c.l.b16 %v1632
    %v1735 = vunpack.c.h.b16 %v1632
    %v1736 = vunpack.c.l.b16 %v1633
    %v1737 = vunpack.c.h.b16 %v1633
    %v1738 = vunpack.c.l.b16 %v1634
    %v1739 = vunpack.c.h.b16 %v1634
    %v1740 = vunpack.c.l.b16 %v1635
    %v1741 = vunpack.c.h.b16 %v1635
    %v1742 = vunpack.c.l.b16 %v1636
    %v1743 = vunpack.c.h.b16 %v1636
    %v1744 = vunpack.c.l.b16 %v1637
    %v1745 = vunpack.c.h.b16 %v1637
    %v1746 = vpack.c.b16 %v1684, %v1682
    %v1747 = vpack.c.b16 %v1685, %v1683
    %v1748 = vpack.c.b16 %v1688, %v1686
    %v1749 = vpack.c.b16 %v1689, %v1687
    %v1750 = vpack.c.b16 %v1692, %v1690
    %v1751 = vpack.c.b16 %v1693, %v1691
    %v1752 = vpack.c.b16 %v1696, %v1694
    %v1753 = vpack.c.b16 %v1697, %v1695
    %v1754 = vpack.c.b16 %v1700, %v1698
    %v1755 = vpack.c.b16 %v1701, %v1699
    %v1756 = vpack.c.b16 %v1704, %v1702
    %v1757 = vpack.c.b16 %v1705, %v1703
    %v1758 = vpack.c.b16 %v1708, %v1706
    %v1759 = vpack.c.b16 %v1709, %v1707
    %v1760 = vpack.c.b16 %v1712, %v1710
    %v1761 = vpack.c.b16 %v1713, %v1711
    %v1762 = vpack.c.b16 %v1716, %v1714
    %v1763 = vpack.c.b16 %v1717, %v1715
    %v1764 = vpack.c.b16 %v1720, %v1718
    %v1765 = vpack.c.b16 %v1721, %v1719
    %v1766 = vpack.c.b16 %v1724, %v1722
    %v1767 = vpack.c.b16 %v1725, %v1723
    %v1768 = vpack.c.b16 %v1728, %v1726
    %v1769 = vpack.c.b16 %v1729, %v1727
    %v1770 = vpack.c.b16 %v1732, %v1730
    %v1771 = vpack.c.b16 %v1733, %v1731
    %v1772 = vpack.c.b16 %v1736, %v1734
    %v1773 = vpack.c.b16 %v1737, %v1735
    %v1774 = vpack.c.b16 %v1740, %v1738
    %v1775 = vpack.c.b16 %v1741, %v1739
    %v1776 = vpack.c.b16 %v1744, %v1742
    %v1777 = vpack.c.b16 %v1745, %v1743
    %1810 = vmatprep.subr.bf16.mxu0 %v1747
    %1811 = vmatpush1.bf16.msra.mxu0 %v1746
    %1812 = vmatprep.subr.bf16.mxu0 %v1749
    %1813 = vmatpush1.bf16.msra.mxu0 %v1748
    %1814 = vmatprep.subr.bf16.mxu0 %v1751
    %1815 = vmatpush1.bf16.msra.mxu0 %v1750
    %1816 = vmatprep.subr.bf16.mxu0 %v1753
    %1817 = vmatpush1.bf16.msra.mxu0 %v1752
    %1818 = vmatprep.subr.bf16.mxu0 %v1755
    %1819 = vmatpush1.bf16.msra.mxu0 %v1754
    %1820 = vmatprep.subr.bf16.mxu0 %v1757
    %1821 = vmatpush1.bf16.msra.mxu0 %v1756
    %1822 = vmatprep.subr.bf16.mxu0 %v1759
    %1823 = vmatpush1.bf16.msra.mxu0 %v1758
    %1824 = vmatprep.subr.bf16.mxu0 %v1761
    %1825 = vmatpush1.bf16.msra.mxu0 %v1760
    %1826 = vmatprep.subr.bf16.mxu0 %v1763
    %1827 = vmatpush1.bf16.msra.mxu0 %v1762
    %1828 = vmatprep.subr.bf16.mxu0 %v1765
    %1829 = vmatpush1.bf16.msra.mxu0 %v1764
    %1830 = vmatprep.subr.bf16.mxu0 %v1767
    %1831 = vmatpush1.bf16.msra.mxu0 %v1766
    %1832 = vmatprep.subr.bf16.mxu0 %v1769
    %1833 = vmatpush1.bf16.msra.mxu0 %v1768
    %1834 = vmatprep.subr.bf16.mxu0 %v1771
    %1835 = vmatpush1.bf16.msra.mxu0 %v1770
    %1836 = vmatprep.subr.bf16.mxu0 %v1773
    %1837 = vmatpush1.bf16.msra.mxu0 %v1772
    %1838 = vmatprep.subr.bf16.mxu0 %v1775
    %1839 = vmatpush1.bf16.msra.mxu0 %v1774
    %1840 = vmatprep.subr.bf16.mxu0 %v1777
    %1841 = vmatpush1.bf16.msra.mxu0 %v1776
    %1842 = vmatprep.mubr.bf16.mxu0 %v1605
    %1843 = vmatmul.mubr.bf16.gmra.mrb[0].mxu0 %v1604
    %v1844 = vpop.f32.mrb[0].mxu0
    %v1845 = vadd.f32 %v1643, %v1844
    %v1846 = vpop.f32.mrb[0].mxu0
    %v1847 = vadd.f32 %v1647, %v1846
    %v1848 = vpop.f32.mrb[0].mxu0
    %v1849 = vpop.f32.mrb[0].mxu0
    %1850 = vdwg.mxu0
    %v1851 = vmul.f32 %v1845, %v1112
    %v1852 = vmul.f32 %v1847, %v1114
    %v1853 = vpack.c.bf16 %v1851, %v1851
    %v1854 = vpack.c.bf16 %v1852, %v1852
    %v1855 = vld [vmem:[#allocation11] sm:$0xff]
    %v1856 = vld [vmem:[#allocation11 + $0x8] sm:$0xff]
    %v1857 = vld [vmem:[#allocation11 + $0x10] sm:$0xff]
    %v1858 = vld [vmem:[#allocation11 + $0x18] sm:$0xff]
    %v1859 = vld [vmem:[#allocation11 + $0x20] sm:$0xff]
    %v1860 = vld [vmem:[#allocation11 + $0x28] sm:$0xff]
    %v1861 = vld [vmem:[#allocation11 + $0x30] sm:$0xff]
    %v1862 = vld [vmem:[#allocation11 + $0x38] sm:$0xff]
    %v1863 = vld [vmem:[#allocation11 + $0x40] sm:$0xff]
    %v1864 = vld [vmem:[#allocation11 + $0x48] sm:$0xff]
    %v1865 = vld [vmem:[#allocation11 + $0x50] sm:$0xff]
    %v1866 = vld [vmem:[#allocation11 + $0x58] sm:$0xff]
    %v1867 = vld [vmem:[#allocation11 + $0x60] sm:$0xff]
    %v1868 = vld [vmem:[#allocation11 + $0x68] sm:$0xff]
    %v1869 = vld [vmem:[#allocation11 + $0x70] sm:$0xff]
    %v1870 = vld [vmem:[#allocation11 + $0x78] sm:$0xff]
    %v1871 = vld [vmem:[#allocation11 + $0x80] sm:$0xff]
    %v1872 = vld [vmem:[#allocation11 + $0x88] sm:$0xff]
    %v1873 = vld [vmem:[#allocation11 + $0x90] sm:$0xff]
    %v1874 = vld [vmem:[#allocation11 + $0x98] sm:$0xff]
    %v1875 = vld [vmem:[#allocation11 + $0xa0] sm:$0xff]
    %v1876 = vld [vmem:[#allocation11 + $0xa8] sm:$0xff]
    %v1877 = vld [vmem:[#allocation11 + $0xb0] sm:$0xff]
    %v1878 = vld [vmem:[#allocation11 + $0xb8] sm:$0xff]
    %v1879 = vld [vmem:[#allocation11 + $0xc0] sm:$0xff]
    %v1880 = vld [vmem:[#allocation11 + $0xc8] sm:$0xff]
    %v1881 = vld [vmem:[#allocation11 + $0xd0] sm:$0xff]
    %v1882 = vld [vmem:[#allocation11 + $0xd8] sm:$0xff]
    %v1883 = vld [vmem:[#allocation11 + $0xe0] sm:$0xff]
    %v1884 = vld [vmem:[#allocation11 + $0xe8] sm:$0xff]
    %v1885 = vld [vmem:[#allocation11 + $0xf0] sm:$0xff]
    %v1886 = vld [vmem:[#allocation11 + $0xf8] sm:$0xff]
    %v1887 = vld [vmem:[%s9] sm:$0x3]
    %v1889 = vlaneseq
    %v1890 = vshrl.u32 %v1889, 7
    %v1891 = vsub.s32 0, %v1890
    %v1892 = vrot.slane %v1887, %v1891
    %v1893 = vlaneseq
    %v1894 = vshrl.u32 %v1893, 7
    %v1895 = vsub.s32 1, %v1894
    %v1896 = vrot.slane %v1887, %v1895
    %v1931 = vunpack.c.l.b16 %v1855
    %v1932 = vunpack.c.h.b16 %v1855
    %v1933 = vunpack.c.l.b16 %v1856
    %v1934 = vunpack.c.h.b16 %v1856
    %v1935 = vunpack.c.l.b16 %v1857
    %v1936 = vunpack.c.h.b16 %v1857
    %v1937 = vunpack.c.l.b16 %v1858
    %v1938 = vunpack.c.h.b16 %v1858
    %v1939 = vunpack.c.l.b16 %v1859
    %v1940 = vunpack.c.h.b16 %v1859
    %v1941 = vunpack.c.l.b16 %v1860
    %v1942 = vunpack.c.h.b16 %v1860
    %v1943 = vunpack.c.l.b16 %v1861
    %v1944 = vunpack.c.h.b16 %v1861
    %v1945 = vunpack.c.l.b16 %v1862
    %v1946 = vunpack.c.h.b16 %v1862
    %v1947 = vunpack.c.l.b16 %v1863
    %v1948 = vunpack.c.h.b16 %v1863
    %v1949 = vunpack.c.l.b16 %v1864
    %v1950 = vunpack.c.h.b16 %v1864
    %v1951 = vunpack.c.l.b16 %v1865
    %v1952 = vunpack.c.h.b16 %v1865
    %v1953 = vunpack.c.l.b16 %v1866
    %v1954 = vunpack.c.h.b16 %v1866
    %v1955 = vunpack.c.l.b16 %v1867
    %v1956 = vunpack.c.h.b16 %v1867
    %v1957 = vunpack.c.l.b16 %v1868
    %v1958 = vunpack.c.h.b16 %v1868
    %v1959 = vunpack.c.l.b16 %v1869
    %v1960 = vunpack.c.h.b16 %v1869
    %v1961 = vunpack.c.l.b16 %v1870
    %v1962 = vunpack.c.h.b16 %v1870
    %v1963 = vunpack.c.l.b16 %v1871
    %v1964 = vunpack.c.h.b16 %v1871
    %v1965 = vunpack.c.l.b16 %v1872
    %v1966 = vunpack.c.h.b16 %v1872
    %v1967 = vunpack.c.l.b16 %v1873
    %v1968 = vunpack.c.h.b16 %v1873
    %v1969 = vunpack.c.l.b16 %v1874
    %v1970 = vunpack.c.h.b16 %v1874
    %v1971 = vunpack.c.l.b16 %v1875
    %v1972 = vunpack.c.h.b16 %v1875
    %v1973 = vunpack.c.l.b16 %v1876
    %v1974 = vunpack.c.h.b16 %v1876
    %v1975 = vunpack.c.l.b16 %v1877
    %v1976 = vunpack.c.h.b16 %v1877
    %v1977 = vunpack.c.l.b16 %v1878
    %v1978 = vunpack.c.h.b16 %v1878
    %v1979 = vunpack.c.l.b16 %v1879
    %v1980 = vunpack.c.h.b16 %v1879
    %v1981 = vunpack.c.l.b16 %v1880
    %v1982 = vunpack.c.h.b16 %v1880
    %v1983 = vunpack.c.l.b16 %v1881
    %v1984 = vunpack.c.h.b16 %v1881
    %v1985 = vunpack.c.l.b16 %v1882
    %v1986 = vunpack.c.h.b16 %v1882
    %v1987 = vunpack.c.l.b16 %v1883
    %v1988 = vunpack.c.h.b16 %v1883
    %v1989 = vunpack.c.l.b16 %v1884
    %v1990 = vunpack.c.h.b16 %v1884
    %v1991 = vunpack.c.l.b16 %v1885
    %v1992 = vunpack.c.h.b16 %v1885
    %v1993 = vunpack.c.l.b16 %v1886
    %v1994 = vunpack.c.h.b16 %v1886
    %v1995 = vpack.c.b16 %v1933, %v1931
    %v1996 = vpack.c.b16 %v1934, %v1932
    %v1997 = vpack.c.b16 %v1937, %v1935
    %v1998 = vpack.c.b16 %v1938, %v1936
    %v1999 = vpack.c.b16 %v1941, %v1939
    %v2000 = vpack.c.b16 %v1942, %v1940
    %v2001 = vpack.c.b16 %v1945, %v1943
    %v2002 = vpack.c.b16 %v1946, %v1944
    %v2003 = vpack.c.b16 %v1949, %v1947
    %v2004 = vpack.c.b16 %v1950, %v1948
    %v2005 = vpack.c.b16 %v1953, %v1951
    %v2006 = vpack.c.b16 %v1954, %v1952
    %v2007 = vpack.c.b16 %v1957, %v1955
    %v2008 = vpack.c.b16 %v1958, %v1956
    %v2009 = vpack.c.b16 %v1961, %v1959
    %v2010 = vpack.c.b16 %v1962, %v1960
    %v2011 = vpack.c.b16 %v1965, %v1963
    %v2012 = vpack.c.b16 %v1966, %v1964
    %v2013 = vpack.c.b16 %v1969, %v1967
    %v2014 = vpack.c.b16 %v1970, %v1968
    %v2015 = vpack.c.b16 %v1973, %v1971
    %v2016 = vpack.c.b16 %v1974, %v1972
    %v2017 = vpack.c.b16 %v1977, %v1975
    %v2018 = vpack.c.b16 %v1978, %v1976
    %v2019 = vpack.c.b16 %v1981, %v1979
    %v2020 = vpack.c.b16 %v1982, %v1980
    %v2021 = vpack.c.b16 %v1985, %v1983
    %v2022 = vpack.c.b16 %v1986, %v1984
    %v2023 = vpack.c.b16 %v1989, %v1987
    %v2024 = vpack.c.b16 %v1990, %v1988
    %v2025 = vpack.c.b16 %v1993, %v1991
    %v2026 = vpack.c.b16 %v1994, %v1992
    %2059 = vmatprep.subr.bf16.mxu0 %v1996
    %2060 = vmatpush1.bf16.msra.mxu0 %v1995
    %2061 = vmatprep.subr.bf16.mxu0 %v1998
    %2062 = vmatpush1.bf16.msra.mxu0 %v1997
    %2063 = vmatprep.subr.bf16.mxu0 %v2000
    %2064 = vmatpush1.bf16.msra.mxu0 %v1999
    %2065 = vmatprep.subr.bf16.mxu0 %v2002
    %2066 = vmatpush1.bf16.msra.mxu0 %v2001
    %2067 = vmatprep.subr.bf16.mxu0 %v2004
    %2068 = vmatpush1.bf16.msra.mxu0 %v2003
    %2069 = vmatprep.subr.bf16.mxu0 %v2006
    %2070 = vmatpush1.bf16.msra.mxu0 %v2005
    %2071 = vmatprep.subr.bf16.mxu0 %v2008
    %2072 = vmatpush1.bf16.msra.mxu0 %v2007
    %2073 = vmatprep.subr.bf16.mxu0 %v2010
    %2074 = vmatpush1.bf16.msra.mxu0 %v2009
    %2075 = vmatprep.subr.bf16.mxu0 %v2012
    %2076 = vmatpush1.bf16.msra.mxu0 %v2011
    %2077 = vmatprep.subr.bf16.mxu0 %v2014
    %2078 = vmatpush1.bf16.msra.mxu0 %v2013
    %2079 = vmatprep.subr.bf16.mxu0 %v2016
    %2080 = vmatpush1.bf16.msra.mxu0 %v2015
    %2081 = vmatprep.subr.bf16.mxu0 %v2018
    %2082 = vmatpush1.bf16.msra.mxu0 %v2017
    %2083 = vmatprep.subr.bf16.mxu0 %v2020
    %2084 = vmatpush1.bf16.msra.mxu0 %v2019
    %2085 = vmatprep.subr.bf16.mxu0 %v2022
    %2086 = vmatpush1.bf16.msra.mxu0 %v2021
    %2087 = vmatprep.subr.bf16.mxu0 %v2024
    %2088 = vmatpush1.bf16.msra.mxu0 %v2023
    %2089 = vmatprep.subr.bf16.mxu0 %v2026
    %2090 = vmatpush1.bf16.msra.mxu0 %v2025
    %2091 = vmatprep.mubr.bf16.mxu0 %v1854
    %2092 = vmatmul.mubr.bf16.gmra.mrb[0].mxu0 %v1853
    %v2093 = vpop.f32.mrb[0].mxu0
    %v2094 = vadd.f32 %v1892, %v2093
    %v2095 = vpop.f32.mrb[0].mxu0
    %v2096 = vadd.f32 %v1896, %v2095
    %v2097 = vpop.f32.mrb[0].mxu0
    %v2098 = vpop.f32.mrb[0].mxu0
    %2099 = vdwg.mxu0
    %2100 = vst [vmem:[#allocation13] sm:$0xff] %v2094
    %2101 = vst [vmem:[#allocation13 + $0x8] sm:$0xff] %v2096
    // Predicated region
    $region66: #{tpu_custom_call.1} parent=1 // pred_check
      _
    $region67: #{tpu_custom_call.1} parent=1 // pred_check_branch
      %2103 = sbr.rel (0) target = $region69
    $region68: #{tpu_custom_call.1} parent=1 // pred_region
      %s2105 = ssub.s32 256, 256
      %2106 = vsyncadd [#allocation4], %s2105
      %s2108 = sshll.u32 [#allocation13], 4
      %s2109 = int_to_ptr.vmem [resolvable:$true] %s2108
      %2111 = dma.vmem_to_hbm [thread:$0]  %s2109, 256, %s10, [#allocation4]
    $region69: #{tpu_custom_call.1} parent=1 // pred_fallthru
      _
    // Predicated region
    $region70: #{tpu_custom_call.1} parent=1 // pred_check
      _
    $region71: #{tpu_custom_call.1} parent=1 // pred_check_branch
      %2113 = sbr.rel (0) target = $region73
    $region72: #{tpu_custom_call.1} parent=1 // pred_region
      %2114 = dma.done [#allocation4], 256
    $region73: #{tpu_custom_call.1} parent=1 // pred_fallthru
      _
    %2115 = vsyncpa [#allocation3], 1
    %2116 = vsyncpa [#allocation6], 1
    %2117 = vsyncpa [#allocation9], 1
    %2118 = vsyncpa [#allocation12], 1
    %2119 = vsyncpa [#allocation4], 1

</llo_original>
